<compile_context>
chip_gen: v5e
topology: v5e:2x2
jax: 0.10.0
libtpu: 0.0.40
codegen_flags: <defaults>
</compile_context>

<pallas_src>
import jax
import jax.numpy as jnp
from jax import lax
from jax.experimental import pallas as pl
from jax.experimental.pallas import tpu as pltpu


_ACTIVATIONS = {
    "relu": lambda v: jnp.maximum(v, 0.0),
    "sigmoid": jax.nn.sigmoid,
    "tanh": jnp.tanh,
}


def _round_up(x, m):
    return (x + m - 1) // m * m


def _make_gru_net_kernel(act_fn):
    def gru_net_kernel(x_ref, w_ih_hbm, w_hh_hbm, w2_hbm,
                       b_gate_ref, b_hh_n_ref, b2_ref,          # inputs
                       out_ref,                                  # output
                       w_ih_ref, w_hh_ref, w2_ref, w_sem,        # scratch: weights
                       h_ref, gi_ref):                           # scratch: state
        c = pl.program_id(0)
        B, HP = h_ref.shape
        T = x_ref.shape[0] // B

        # ---- One-time setup (chunk 0): load the grid-invariant weights into a
        # SINGLE resident VMEM copy each (no double-buffering for constants),
        # and zero the initial hidden state (PyTorch default h_0 = 0).
        @pl.when(c == 0)
        def _():
            copies = (pltpu.make_async_copy(w_ih_hbm, w_ih_ref, w_sem.at[0]),
                      pltpu.make_async_copy(w_hh_hbm, w_hh_ref, w_sem.at[1]),
                      pltpu.make_async_copy(w2_hbm, w2_ref, w_sem.at[2]))
            for cp in copies:
                cp.start()
            for cp in copies:
                cp.wait()
            h_ref[...] = jnp.zeros_like(h_ref)

        # ---- Prologue (hoisted off the recurrence): fused input projection for
        # the whole chunk -- one (T*B, IP) @ (IP, 3*HP) bf16 matmul with f32
        # accumulation; biases pre-folded (b_ih + b_hh for r/z, b_ih for n).
        gi_ref[...] = jnp.dot(x_ref[...], w_ih_ref[...],
                              preferred_element_type=jnp.float32) + b_gate_ref[...]

        # Hoisted broadcast (JAX does not CSE broadcast_in_dim; do it once, not
        # once per unrolled iteration of the loop).
        b_hh_n_b = jnp.broadcast_to(b_hh_n_ref[...], (B, HP))

        # ---- Recurrence: ONE fused (B, HP) @ (HP, 3*HP) matmul per step.
        # h is carried in f32; only the MXU operands are bf16.
        def step(t, h):
            row = pl.ds(pl.multiple_of(t * B, B), B)
            gi_t = gi_ref[row, :]                                     # (B, 3*HP) f32
            gh = jnp.dot(h.astype(w_hh_ref.dtype), w_hh_ref[...],
                         preferred_element_type=jnp.float32)          # (B, 3*HP) f32
            r = jax.nn.sigmoid(gi_t[:, 0:HP] + gh[:, 0:HP])
            z = jax.nn.sigmoid(gi_t[:, HP:2 * HP] + gh[:, HP:2 * HP])
            n = jnp.tanh(gi_t[:, 2 * HP:] + r * (gh[:, 2 * HP:] + b_hh_n_b))
            h_new = n + z * (h - n)      # shorter h->h dep chain than (1-z)*n + z*h
            gi_ref[row, 0:HP] = h_new    # reuse consumed r-gate slot as the hs slab
            return h_new

        h_ref[...] = lax.fori_loop(0, T, step, h_ref[...], unroll=min(T, 8))

        # ---- Epilogue (hoisted): activation + Linear over the whole chunk,
        # one MXU matmul and one lane-dense (128-wide) store.
        act = act_fn(gi_ref[:, 0:HP]).astype(w2_ref.dtype)
        out_ref[...] = (jnp.dot(act, w2_ref[...], preferred_element_type=jnp.float32)
                        + b2_ref[...]).astype(out_ref.dtype)

    return gru_net_kernel


def _default_time_chunk(S, B, ip, hp, op, budget_bytes):
    """Largest divisor of S whose per-chunk VMEM footprint fits the budget."""
    per_step = B * (3 * hp * 4      # gi / hs slab (f32, single copy)
                    + 2 * ip * 2    # x chunk (bf16, double-buffered)
                    + 2 * op * 4)   # out chunk (f32, double-buffered)
    fixed = 2 * (ip + hp) * 3 * hp + 2 * hp * op   # resident bf16 weights
    fixed += 4 * (3 * hp + hp + op) * 2            # small bias blocks
    fixed += 4 * B * hp                            # hidden-state carry
    cap = max(1, (budget_bytes - fixed) // per_step)
    t = int(min(S, cap))
    while S % t:
        t -= 1
    return t


def gru_neural_network(x, packed, *, activation="relu", time_chunk=None,
                       vmem_budget_bytes=48 * 1024 * 1024):
    """x: (S, B, I) float32.  packed: dict from pack_params().  Returns (S, B, O)."""
    S, B, I = x.shape
    assert B % 8 == 0, "batch must be a multiple of 8 (f32 sublane collapse)"
    I0, H0, O0, IP, HP, OP = packed["dims"]
    assert I == I0
    mxu_dtype = packed["w_ih_f"].dtype

    # Pad features to the lane width, flatten (S, B) -> rows, cast MXU operand
    # to bf16.  The kernel works on a lane-dense (rows, 128k) layout throughout.
    x2d = jnp.pad(x, ((0, 0), (0, 0), (0, IP - I))).reshape(S * B, IP).astype(mxu_dtype)

    T = _default_time_chunk(S, B, IP, HP, OP, vmem_budget_bytes) \
        if time_chunk is None else time_chunk
    assert S % T == 0, "time_chunk must divide seq_len"

    out2d = pl.pallas_call(
        _make_gru_net_kernel(_ACTIVATIONS[activation]),
        out_shape=jax.ShapeDtypeStruct((S * B, OP), jnp.float32),
        grid_spec=pltpu.PrefetchScalarGridSpec(
            num_scalar_prefetch=0,
            grid=(S // T,),
            in_specs=[
                pl.BlockSpec((T * B, IP), lambda c: (c, 0)),   # x chunk (bf16)
                pl.BlockSpec(memory_space=pl.ANY),             # fused W_ih (HBM)
                pl.BlockSpec(memory_space=pl.ANY),             # fused W_hh (HBM)
                pl.BlockSpec(memory_space=pl.ANY),             # W2^T (HBM)
                pl.BlockSpec((1, 3 * HP), lambda c: (0, 0)),   # folded gate biases
                pl.BlockSpec((1, HP), lambda c: (0, 0)),       # b_hh_n
                pl.BlockSpec((1, OP), lambda c: (0, 0)),       # b2
            ],
            out_specs=pl.BlockSpec((T * B, OP), lambda c: (c, 0)),
            scratch_shapes=[
                pltpu.VMEM((IP, 3 * HP), mxu_dtype),       # resident W_ih (1 copy)
                pltpu.VMEM((HP, 3 * HP), mxu_dtype),       # resident W_hh (1 copy)
                pltpu.VMEM((HP, OP), mxu_dtype),           # resident W2^T (1 copy)
                pltpu.SemaphoreType.DMA((3,)),             # weight-load semaphores
                pltpu.VMEM((B, HP), jnp.float32),          # hidden-state carry
                pltpu.VMEM((T * B, 3 * HP), jnp.float32),  # gi slab; r-slot reused as hs
            ],
        ),
        compiler_params=pltpu.CompilerParams(
            dimension_semantics=("arbitrary",),            # time recurrence is sequential
            vmem_limit_bytes=int(vmem_budget_bytes),
        ),
    )(x2d, packed["w_ih_f"], packed["w_hh_f"], packed["w2_t"],
      packed["b_gate"], packed["b_hh_n"], packed["b2"])

    return out2d.reshape(S, B, OP)[:, :, :O0]


# ----------------------------------------------------------------------------
# Parameter construction (PyTorch layout) + packing + pure-JAX reference.
# ----------------------------------------------------------------------------
def init_torch_params(key, input_size, hidden_size, output_size):
    """PyTorch-style uniform(-1/sqrt(H), 1/sqrt(H)) init, PyTorch layouts."""
    ks = jax.random.split(key, 6)
    k = 1.0 / jnp.sqrt(hidden_size)
    u = lambda kk, shape: jax.random.uniform(kk, shape, jnp.float32, -k, k)
    return {
        "w_ih": u(ks[0], (3 * hidden_size, input_size)),    # weight_ih_l0 (3H, I)
        "w_hh": u(ks[1], (3 * hidden_size, hidden_size)),   # weight_hh_l0 (3H, H)
        "b_ih": u(ks[2], (3 * hidden_size,)),
        "b_hh": u(ks[3], (3 * hidden_size,)),
        "w2": u(ks[4], (output_size, hidden_size)),          # nn.Linear weight (O, H)
        "b2": u(ks[5], (output_size,)),
    }


def pack_params(p, *, lane=128, mxu_dtype=jnp.bfloat16):
    """Repack PyTorch-layout params into the kernel's fused, padded, bf16 layout."""
    w_ih, w_hh = p["w_ih"], p["w_hh"]
    b_ih, b_hh = p["b_ih"], p["b_hh"]
    w2, b2 = p["w2"], p["b2"]
    H = w_hh.shape[1]
    I = w_ih.shape[1]
    O = w2.shape[0]
    IP, HP, OP = _round_up(I, lane), _round_up(H, lane), _round_up(O, lane)

    # Gate-major (3, in, H), zero-padded, then fused along lanes: [ r | z | n ].
    w_ih_g = jnp.transpose(w_ih.reshape(3, H, I), (0, 2, 1))        # (3, I, H)
    w_hh_g = jnp.transpose(w_hh.reshape(3, H, H), (0, 2, 1))        # (3, H, H)
    w_ih_g = jnp.pad(w_ih_g, ((0, 0), (0, IP - I), (0, HP - H)))
    w_hh_g = jnp.pad(w_hh_g, ((0, 0), (0, HP - H), (0, HP - H)))
    w_ih_f = jnp.transpose(w_ih_g, (1, 0, 2)).reshape(IP, 3 * HP).astype(mxu_dtype)
    w_hh_f = jnp.transpose(w_hh_g, (1, 0, 2)).reshape(HP, 3 * HP).astype(mxu_dtype)

    b_ih_g = jnp.pad(b_ih.reshape(3, H), ((0, 0), (0, HP - H)))
    b_hh_g = jnp.pad(b_hh.reshape(3, H), ((0, 0), (0, HP - H)))
    # r/z gates: fold b_ih + b_hh.  n gate: only b_ih (b_hh_n is r-gated).
    b_gate = jnp.concatenate([b_ih_g[0:2] + b_hh_g[0:2], b_ih_g[2:3]], axis=0)
    b_gate = b_gate.reshape(1, 3 * HP).astype(jnp.float32)
    b_hh_n = b_hh_g[2:3].astype(jnp.float32)                         # (1, HP)

    w2_t = jnp.pad(w2.T, ((0, HP - H), (0, OP - O))).astype(mxu_dtype)   # (HP, OP)
    b2_p = jnp.pad(b2, (0, OP - O)).reshape(1, OP).astype(jnp.float32)

    return {"w_ih_f": w_ih_f, "w_hh_f": w_hh_f, "b_gate": b_gate,
            "b_hh_n": b_hh_n, "w2_t": w2_t, "b2": b2_p,
            "dims": (I, H, O, IP, HP, OP)}


def gru_neural_network_ref(x, p, *, activation="relu", mxu_dtype=jnp.float32):
    """Pure-JAX reference of the PyTorch forward.  mxu_dtype=jnp.bfloat16
    reproduces the kernel's MXU-operand precision (gate math stays f32)."""
    act_fn = _ACTIVATIONS[activation]

    def mm(a, b):
        return jnp.dot(a.astype(mxu_dtype), b.astype(mxu_dtype),
                       preferred_element_type=jnp.float32)

    H = p["w_hh"].shape[1]
    w_ih_t, w_hh_t = p["w_ih"].T, p["w_hh"].T

    def step(h, x_t):
        gi = mm(x_t, w_ih_t) + p["b_ih"]
        gh = mm(h, w_hh_t) + p["b_hh"]
        i_r, i_z, i_n = jnp.split(gi, 3, axis=-1)
        h_r, h_z, h_n = jnp.split(gh, 3, axis=-1)
        r = jax.nn.sigmoid(i_r + h_r)
        z = jax.nn.sigmoid(i_z + h_z)
        n = jnp.tanh(i_n + r * h_n)
        h_new = (1.0 - z) * n + z * h
        return h_new, h_new

    h0 = jnp.zeros((x.shape[1], H), jnp.float32)
    _, hs = lax.scan(step, h0, x)
    return mm(act_fn(hs), p["w2"].T) + p["b2"]


if __name__ == "__main__":
    # Small shapes consistent with the module defaults (input_size=102,
    # hidden_size1=64); B is a multiple of 8 (f32 sublanes).
    S, B, I, H, O = 8, 8, 102, 64, 8

    key = jax.random.PRNGKey(0)
    kx, kp = jax.random.split(key)
    x = jax.random.normal(kx, (S, B, I), jnp.float32)
    torch_params = init_torch_params(kp, I, H, O)
    packed = pack_params(torch_params)

    out = jax.block_until_ready(gru_neural_network(x, packed))
    assert out.shape == (S, B, O)

    # Tight check vs. a reference that mirrors the kernel's bf16 MXU operands.
    ref_bf16 = jax.block_until_ready(
        gru_neural_network_ref(x, torch_params, mxu_dtype=jnp.bfloat16))
    assert jnp.allclose(out, ref_bf16, atol=2e-3, rtol=2e-3), (
        float(jnp.max(jnp.abs(out - ref_bf16))))

    # Loose sanity check vs. the pure-f32 PyTorch-semantics reference.
    ref_f32 = jax.block_until_ready(gru_neural_network_ref(x, torch_params))
    assert jnp.allclose(out, ref_f32, atol=5e-2, rtol=5e-2), (
        float(jnp.max(jnp.abs(out - ref_f32))))

    print("KERNEL_OK")
</pallas_src>

<mosaic_0001>
module attributes {stable_mosaic.version = 11 : i64} {
  func.func @gru_net_kernel(%arg0: i32, %arg1: memref<64x128xbf16, #tpu.memory_space<vmem>>, %arg2: memref<128x384xbf16, #tpu.memory_space<any>>, %arg3: memref<128x384xbf16, #tpu.memory_space<any>>, %arg4: memref<128x128xbf16, #tpu.memory_space<any>>, %arg5: memref<1x384xf32, #tpu.memory_space<vmem>>, %arg6: memref<1x128xf32, #tpu.memory_space<vmem>>, %arg7: memref<1x128xf32, #tpu.memory_space<vmem>>, %arg8: memref<64x128xf32, #tpu.memory_space<vmem>>, %arg9: memref<128x384xbf16, #tpu.memory_space<vmem>>, %arg10: memref<128x384xbf16, #tpu.memory_space<vmem>>, %arg11: memref<128x128xbf16, #tpu.memory_space<vmem>>, %arg12: memref<3x!tpu.dma_semaphore, #tpu.memory_space<semaphore_mem>>, %arg13: memref<8x128xf32, #tpu.memory_space<vmem>>, %arg14: memref<64x384xf32, #tpu.memory_space<vmem>>) attributes {dimension_semantics = [#tpu.dimension_semantics<arbitrary>], iteration_bounds = array<i64: 1>, scalar_prefetch = 0 : i64, scratch_operands = 6 : i64, tpu.core_type = #tpu.core_type<tc>, window_params = [{transform_indices = @transform_0, window_bounds = array<i64: 64, 128>}, {}, {}, {}, {pipeline_mode = #tpu.pipeline_mode<synchronous>, transform_indices = @transform_4, window_bounds = array<i64: 1, 384>}, {pipeline_mode = #tpu.pipeline_mode<synchronous>, transform_indices = @transform_5, window_bounds = array<i64: 1, 128>}, {pipeline_mode = #tpu.pipeline_mode<synchronous>, transform_indices = @transform_6, window_bounds = array<i64: 1, 128>}, {transform_indices = @transform_7, window_bounds = array<i64: 64, 128>}]} {
    %c0_i32 = arith.constant 0 : i32
    %0 = arith.cmpi eq, %arg0, %c0_i32 : i32
    %1 = arith.extui %0 : i1 to i32
    %c0_i32_0 = arith.constant 0 : i32
    %2 = arith.cmpi ne, %1, %c0_i32_0 : i32
    scf.if %2 {
      %c0_i32_89 = arith.constant 0 : i32
      %297 = tpu.memref_slice %arg12[%c0_i32_89] : memref<3x!tpu.dma_semaphore, #tpu.memory_space<semaphore_mem>> -> memref<1x!tpu.dma_semaphore, #tpu.memory_space<semaphore_mem>>
      %298 = tpu.memref_squeeze %297 : memref<1x!tpu.dma_semaphore, #tpu.memory_space<semaphore_mem>> -> memref<!tpu.dma_semaphore, #tpu.memory_space<semaphore_mem>>
      tpu.enqueue_dma source(%arg2 : memref<128x384xbf16, #tpu.memory_space<any>>) target(%arg9 : memref<128x384xbf16, #tpu.memory_space<vmem>>) target_semaphore(%298 : memref<!tpu.dma_semaphore, #tpu.memory_space<semaphore_mem>>)
      %c1_i32_90 = arith.constant 1 : i32
      %299 = tpu.memref_slice %arg12[%c1_i32_90] : memref<3x!tpu.dma_semaphore, #tpu.memory_space<semaphore_mem>> -> memref<1x!tpu.dma_semaphore, #tpu.memory_space<semaphore_mem>>
      %300 = tpu.memref_squeeze %299 : memref<1x!tpu.dma_semaphore, #tpu.memory_space<semaphore_mem>> -> memref<!tpu.dma_semaphore, #tpu.memory_space<semaphore_mem>>
      tpu.enqueue_dma source(%arg3 : memref<128x384xbf16, #tpu.memory_space<any>>) target(%arg10 : memref<128x384xbf16, #tpu.memory_space<vmem>>) target_semaphore(%300 : memref<!tpu.dma_semaphore, #tpu.memory_space<semaphore_mem>>)
      %c2_i32_91 = arith.constant 2 : i32
      %301 = tpu.memref_slice %arg12[%c2_i32_91] : memref<3x!tpu.dma_semaphore, #tpu.memory_space<semaphore_mem>> -> memref<1x!tpu.dma_semaphore, #tpu.memory_space<semaphore_mem>>
      %302 = tpu.memref_squeeze %301 : memref<1x!tpu.dma_semaphore, #tpu.memory_space<semaphore_mem>> -> memref<!tpu.dma_semaphore, #tpu.memory_space<semaphore_mem>>
      tpu.enqueue_dma source(%arg4 : memref<128x128xbf16, #tpu.memory_space<any>>) target(%arg11 : memref<128x128xbf16, #tpu.memory_space<vmem>>) target_semaphore(%302 : memref<!tpu.dma_semaphore, #tpu.memory_space<semaphore_mem>>)
      %c0_i32_92 = arith.constant 0 : i32
      %303 = tpu.memref_slice %arg12[%c0_i32_92] : memref<3x!tpu.dma_semaphore, #tpu.memory_space<semaphore_mem>> -> memref<1x!tpu.dma_semaphore, #tpu.memory_space<semaphore_mem>>
      %304 = tpu.memref_squeeze %303 : memref<1x!tpu.dma_semaphore, #tpu.memory_space<semaphore_mem>> -> memref<!tpu.dma_semaphore, #tpu.memory_space<semaphore_mem>>
      tpu.wait_dma2 semaphore(%304 : memref<!tpu.dma_semaphore, #tpu.memory_space<semaphore_mem>>) src(%arg2 : memref<128x384xbf16, #tpu.memory_space<any>>) dst(%arg9 : memref<128x384xbf16, #tpu.memory_space<vmem>>)
      %c1_i32_93 = arith.constant 1 : i32
      %305 = tpu.memref_slice %arg12[%c1_i32_93] : memref<3x!tpu.dma_semaphore, #tpu.memory_space<semaphore_mem>> -> memref<1x!tpu.dma_semaphore, #tpu.memory_space<semaphore_mem>>
      %306 = tpu.memref_squeeze %305 : memref<1x!tpu.dma_semaphore, #tpu.memory_space<semaphore_mem>> -> memref<!tpu.dma_semaphore, #tpu.memory_space<semaphore_mem>>
      tpu.wait_dma2 semaphore(%306 : memref<!tpu.dma_semaphore, #tpu.memory_space<semaphore_mem>>) src(%arg3 : memref<128x384xbf16, #tpu.memory_space<any>>) dst(%arg10 : memref<128x384xbf16, #tpu.memory_space<vmem>>)
      %c2_i32_94 = arith.constant 2 : i32
      %307 = tpu.memref_slice %arg12[%c2_i32_94] : memref<3x!tpu.dma_semaphore, #tpu.memory_space<semaphore_mem>> -> memref<1x!tpu.dma_semaphore, #tpu.memory_space<semaphore_mem>>
      %308 = tpu.memref_squeeze %307 : memref<1x!tpu.dma_semaphore, #tpu.memory_space<semaphore_mem>> -> memref<!tpu.dma_semaphore, #tpu.memory_space<semaphore_mem>>
      tpu.wait_dma2 semaphore(%308 : memref<!tpu.dma_semaphore, #tpu.memory_space<semaphore_mem>>) src(%arg4 : memref<128x128xbf16, #tpu.memory_space<any>>) dst(%arg11 : memref<128x128xbf16, #tpu.memory_space<vmem>>)
      %cst_95 = arith.constant 0.000000e+00 : f32
      %309 = vector.broadcast %cst_95 : f32 to vector<8x128xf32>
      %c0_96 = arith.constant 0 : index
      %c0_97 = arith.constant 0 : index
      %310 = vector.load %arg13[%c0_96, %c0_97] : memref<8x128xf32, #tpu.memory_space<vmem>>, vector<8x128xf32>
      tpu.vector_store %arg13[%c0_96, %c0_97], %309 {strides = array<i32>} : memref<8x128xf32, #tpu.memory_space<vmem>>, vector<8x128xf32>,
    } else {
    }
    %c0 = arith.constant 0 : index
    %c0_1 = arith.constant 0 : index
    %3 = vector.load %arg1[%c0, %c0_1] : memref<64x128xbf16, #tpu.memory_space<vmem>>, vector<64x128xbf16>
    %c0_2 = arith.constant 0 : index
    %c0_3 = arith.constant 0 : index
    %4 = vector.load %arg9[%c0_2, %c0_3] : memref<128x384xbf16, #tpu.memory_space<vmem>>, vector<128x384xbf16>
    %cst = arith.constant dense<0.000000e+00> : vector<64x384xf32>
    %5 = tpu.matmul %3, %4, %cst {dimension_numbers = #tpu.dot_dimension_numbers<[1], [0], [0], [1], [0, 0, 1, 1], [], []>} : vector<64x128xbf16>, vector<128x384xbf16>, vector<64x384xf32> -> vector<64x384xf32>
    %c0_4 = arith.constant 0 : index
    %c0_5 = arith.constant 0 : index
    %6 = vector.load %arg5[%c0_4, %c0_5] : memref<1x384xf32, #tpu.memory_space<vmem>>, vector<1x384xf32>
    %7 = vector.broadcast %6 : vector<1x384xf32> to vector<64x384xf32>
    %8 = arith.addf %5, %7 : vector<64x384xf32>
    %c0_6 = arith.constant 0 : index
    %c0_7 = arith.constant 0 : index
    %9 = vector.load %arg14[%c0_6, %c0_7] : memref<64x384xf32, #tpu.memory_space<vmem>>, vector<64x384xf32>
    tpu.vector_store %arg14[%c0_6, %c0_7], %8 {strides = array<i32>} : memref<64x384xf32, #tpu.memory_space<vmem>>, vector<64x384xf32>,
    %c0_8 = arith.constant 0 : index
    %c0_9 = arith.constant 0 : index
    %10 = vector.load %arg6[%c0_8, %c0_9] : memref<1x128xf32, #tpu.memory_space<vmem>>, vector<1x128xf32>
    %11 = vector.shape_cast %10 : vector<1x128xf32> to vector<1x128xf32>
    %12 = vector.broadcast %11 : vector<1x128xf32> to vector<8x128xf32>
    %c0_10 = arith.constant 0 : index
    %c0_11 = arith.constant 0 : index
    %13 = vector.load %arg13[%c0_10, %c0_11] : memref<8x128xf32, #tpu.memory_space<vmem>>, vector<8x128xf32>
    %c0_i32_12 = arith.constant 0 : i32
    %c8_i32 = arith.constant 8 : i32
    %14 = arith.muli %c0_i32_12, %c8_i32 : i32
    %15 = tpu.assume_multiple %14, 8 : i32
    %16 = arith.index_cast %15 : i32 to index
    %c0_13 = arith.constant 0 : index
    %17 = vector.load %arg14[%16, %c0_13] : memref<64x384xf32, #tpu.memory_space<vmem>>, vector<8x384xf32>
    %18 = arith.truncf %13 : vector<8x128xf32> to vector<8x128xbf16>
    %c0_14 = arith.constant 0 : index
    %c0_15 = arith.constant 0 : index
    %19 = vector.load %arg10[%c0_14, %c0_15] : memref<128x384xbf16, #tpu.memory_space<vmem>>, vector<128x384xbf16>
    %cst_16 = arith.constant dense<0.000000e+00> : vector<8x384xf32>
    %20 = tpu.matmul %18, %19, %cst_16 {dimension_numbers = #tpu.dot_dimension_numbers<[1], [0], [0], [1], [0, 0, 1, 1], [], []>} : vector<8x128xbf16>, vector<128x384xbf16>, vector<8x384xf32> -> vector<8x384xf32>
    %21 = vector.extract_strided_slice %17 {offsets = [0, 0], sizes = [8, 128], strides = [1, 1]} : vector<8x384xf32> to vector<8x128xf32>
    %22 = vector.extract_strided_slice %20 {offsets = [0, 0], sizes = [8, 128], strides = [1, 1]} : vector<8x384xf32> to vector<8x128xf32>
    %23 = arith.addf %21, %22 : vector<8x128xf32>
    %24 = arith.negf %23 : vector<8x128xf32>
    %25 = math.exp %24 : vector<8x128xf32>
    %cst_17 = arith.constant 1.000000e+00 : f32
    %26 = vector.broadcast %cst_17 : f32 to vector<8x128xf32>
    %27 = arith.addf %26, %25 : vector<8x128xf32>
    %28 = arith.divf %26, %27 : vector<8x128xf32>
    %29 = vector.extract_strided_slice %17 {offsets = [0, 128], sizes = [8, 128], strides = [1, 1]} : vector<8x384xf32> to vector<8x128xf32>
    %30 = vector.extract_strided_slice %20 {offsets = [0, 128], sizes = [8, 128], strides = [1, 1]} : vector<8x384xf32> to vector<8x128xf32>
    %31 = arith.addf %29, %30 : vector<8x128xf32>
    %32 = arith.negf %31 : vector<8x128xf32>
    %33 = math.exp %32 : vector<8x128xf32>
    %cst_18 = arith.constant 1.000000e+00 : f32
    %34 = vector.broadcast %cst_18 : f32 to vector<8x128xf32>
    %35 = arith.addf %34, %33 : vector<8x128xf32>
    %36 = arith.divf %34, %35 : vector<8x128xf32>
    %37 = vector.extract_strided_slice %17 {offsets = [0, 256], sizes = [8, 128], strides = [1, 1]} : vector<8x384xf32> to vector<8x128xf32>
    %38 = vector.extract_strided_slice %20 {offsets = [0, 256], sizes = [8, 128], strides = [1, 1]} : vector<8x384xf32> to vector<8x128xf32>
    %39 = arith.addf %38, %12 : vector<8x128xf32>
    %40 = arith.mulf %28, %39 : vector<8x128xf32>
    %41 = arith.addf %37, %40 : vector<8x128xf32>
    %42 = math.tanh %41 : vector<8x128xf32>
    %43 = arith.subf %13, %42 : vector<8x128xf32>
    %44 = arith.mulf %36, %43 : vector<8x128xf32>
    %45 = arith.addf %42, %44 : vector<8x128xf32>
    %46 = arith.index_cast %15 : i32 to index
    %c0_19 = arith.constant 0 : index
    %47 = vector.load %arg14[%46, %c0_19] : memref<64x384xf32, #tpu.memory_space<vmem>>, vector<8x128xf32>
    tpu.vector_store %arg14[%46, %c0_19], %45 {strides = array<i32>} : memref<64x384xf32, #tpu.memory_space<vmem>>, vector<8x128xf32>,
    %c1_i32 = arith.constant 1 : i32
    %c8_i32_20 = arith.constant 8 : i32
    %48 = arith.muli %c1_i32, %c8_i32_20 : i32
    %49 = tpu.assume_multiple %48, 8 : i32
    %50 = arith.index_cast %49 : i32 to index
    %c0_21 = arith.constant 0 : index
    %51 = vector.load %arg14[%50, %c0_21] : memref<64x384xf32, #tpu.memory_space<vmem>>, vector<8x384xf32>
    %52 = arith.truncf %45 : vector<8x128xf32> to vector<8x128xbf16>
    %c0_22 = arith.constant 0 : index
    %c0_23 = arith.constant 0 : index
    %53 = vector.load %arg10[%c0_22, %c0_23] : memref<128x384xbf16, #tpu.memory_space<vmem>>, vector<128x384xbf16>
    %cst_24 = arith.constant dense<0.000000e+00> : vector<8x384xf32>
    %54 = tpu.matmul %52, %53, %cst_24 {dimension_numbers = #tpu.dot_dimension_numbers<[1], [0], [0], [1], [0, 0, 1, 1], [], []>} : vector<8x128xbf16>, vector<128x384xbf16>, vector<8x384xf32> -> vector<8x384xf32>
    %55 = vector.extract_strided_slice %51 {offsets = [0, 0], sizes = [8, 128], strides = [1, 1]} : vector<8x384xf32> to vector<8x128xf32>
    %56 = vector.extract_strided_slice %54 {offsets = [0, 0], sizes = [8, 128], strides = [1, 1]} : vector<8x384xf32> to vector<8x128xf32>
    %57 = arith.addf %55, %56 : vector<8x128xf32>
    %58 = arith.negf %57 : vector<8x128xf32>
    %59 = math.exp %58 : vector<8x128xf32>
    %cst_25 = arith.constant 1.000000e+00 : f32
    %60 = vector.broadcast %cst_25 : f32 to vector<8x128xf32>
    %61 = arith.addf %60, %59 : vector<8x128xf32>
    %62 = arith.divf %60, %61 : vector<8x128xf32>
    %63 = vector.extract_strided_slice %51 {offsets = [0, 128], sizes = [8, 128], strides = [1, 1]} : vector<8x384xf32> to vector<8x128xf32>
    %64 = vector.extract_strided_slice %54 {offsets = [0, 128], sizes = [8, 128], strides = [1, 1]} : vector<8x384xf32> to vector<8x128xf32>
    %65 = arith.addf %63, %64 : vector<8x128xf32>
    %66 = arith.negf %65 : vector<8x128xf32>
    %67 = math.exp %66 : vector<8x128xf32>
    %cst_26 = arith.constant 1.000000e+00 : f32
    %68 = vector.broadcast %cst_26 : f32 to vector<8x128xf32>
    %69 = arith.addf %68, %67 : vector<8x128xf32>
    %70 = arith.divf %68, %69 : vector<8x128xf32>
    %71 = vector.extract_strided_slice %51 {offsets = [0, 256], sizes = [8, 128], strides = [1, 1]} : vector<8x384xf32> to vector<8x128xf32>
    %72 = vector.extract_strided_slice %54 {offsets = [0, 256], sizes = [8, 128], strides = [1, 1]} : vector<8x384xf32> to vector<8x128xf32>
    %73 = arith.addf %72, %12 : vector<8x128xf32>
    %74 = arith.mulf %62, %73 : vector<8x128xf32>
    %75 = arith.addf %71, %74 : vector<8x128xf32>
    %76 = math.tanh %75 : vector<8x128xf32>
    %77 = arith.subf %45, %76 : vector<8x128xf32>
    %78 = arith.mulf %70, %77 : vector<8x128xf32>
    %79 = arith.addf %76, %78 : vector<8x128xf32>
    %80 = arith.index_cast %49 : i32 to index
    %c0_27 = arith.constant 0 : index
    %81 = vector.load %arg14[%80, %c0_27] : memref<64x384xf32, #tpu.memory_space<vmem>>, vector<8x128xf32>
    tpu.vector_store %arg14[%80, %c0_27], %79 {strides = array<i32>} : memref<64x384xf32, #tpu.memory_space<vmem>>, vector<8x128xf32>,
    %c2_i32 = arith.constant 2 : i32
    %c8_i32_28 = arith.constant 8 : i32
    %82 = arith.muli %c2_i32, %c8_i32_28 : i32
    %83 = tpu.assume_multiple %82, 8 : i32
    %84 = arith.index_cast %83 : i32 to index
    %c0_29 = arith.constant 0 : index
    %85 = vector.load %arg14[%84, %c0_29] : memref<64x384xf32, #tpu.memory_space<vmem>>, vector<8x384xf32>
    %86 = arith.truncf %79 : vector<8x128xf32> to vector<8x128xbf16>
    %c0_30 = arith.constant 0 : index
    %c0_31 = arith.constant 0 : index
    %87 = vector.load %arg10[%c0_30, %c0_31] : memref<128x384xbf16, #tpu.memory_space<vmem>>, vector<128x384xbf16>
    %cst_32 = arith.constant dense<0.000000e+00> : vector<8x384xf32>
    %88 = tpu.matmul %86, %87, %cst_32 {dimension_numbers = #tpu.dot_dimension_numbers<[1], [0], [0], [1], [0, 0, 1, 1], [], []>} : vector<8x128xbf16>, vector<128x384xbf16>, vector<8x384xf32> -> vector<8x384xf32>
    %89 = vector.extract_strided_slice %85 {offsets = [0, 0], sizes = [8, 128], strides = [1, 1]} : vector<8x384xf32> to vector<8x128xf32>
    %90 = vector.extract_strided_slice %88 {offsets = [0, 0], sizes = [8, 128], strides = [1, 1]} : vector<8x384xf32> to vector<8x128xf32>
    %91 = arith.addf %89, %90 : vector<8x128xf32>
    %92 = arith.negf %91 : vector<8x128xf32>
    %93 = math.exp %92 : vector<8x128xf32>
    %cst_33 = arith.constant 1.000000e+00 : f32
    %94 = vector.broadcast %cst_33 : f32 to vector<8x128xf32>
    %95 = arith.addf %94, %93 : vector<8x128xf32>
    %96 = arith.divf %94, %95 : vector<8x128xf32>
    %97 = vector.extract_strided_slice %85 {offsets = [0, 128], sizes = [8, 128], strides = [1, 1]} : vector<8x384xf32> to vector<8x128xf32>
    %98 = vector.extract_strided_slice %88 {offsets = [0, 128], sizes = [8, 128], strides = [1, 1]} : vector<8x384xf32> to vector<8x128xf32>
    %99 = arith.addf %97, %98 : vector<8x128xf32>
    %100 = arith.negf %99 : vector<8x128xf32>
    %101 = math.exp %100 : vector<8x128xf32>
    %cst_34 = arith.constant 1.000000e+00 : f32
    %102 = vector.broadcast %cst_34 : f32 to vector<8x128xf32>
    %103 = arith.addf %102, %101 : vector<8x128xf32>
    %104 = arith.divf %102, %103 : vector<8x128xf32>
    %105 = vector.extract_strided_slice %85 {offsets = [0, 256], sizes = [8, 128], strides = [1, 1]} : vector<8x384xf32> to vector<8x128xf32>
    %106 = vector.extract_strided_slice %88 {offsets = [0, 256], sizes = [8, 128], strides = [1, 1]} : vector<8x384xf32> to vector<8x128xf32>
    %107 = arith.addf %106, %12 : vector<8x128xf32>
    %108 = arith.mulf %96, %107 : vector<8x128xf32>
    %109 = arith.addf %105, %108 : vector<8x128xf32>
    %110 = math.tanh %109 : vector<8x128xf32>
    %111 = arith.subf %79, %110 : vector<8x128xf32>
    %112 = arith.mulf %104, %111 : vector<8x128xf32>
    %113 = arith.addf %110, %112 : vector<8x128xf32>
    %114 = arith.index_cast %83 : i32 to index
    %c0_35 = arith.constant 0 : index
    %115 = vector.load %arg14[%114, %c0_35] : memref<64x384xf32, #tpu.memory_space<vmem>>, vector<8x128xf32>
    tpu.vector_store %arg14[%114, %c0_35], %113 {strides = array<i32>} : memref<64x384xf32, #tpu.memory_space<vmem>>, vector<8x128xf32>,
    %c3_i32 = arith.constant 3 : i32
    %c8_i32_36 = arith.constant 8 : i32
    %116 = arith.muli %c3_i32, %c8_i32_36 : i32
    %117 = tpu.assume_multiple %116, 8 : i32
    %118 = arith.index_cast %117 : i32 to index
    %c0_37 = arith.constant 0 : index
    %119 = vector.load %arg14[%118, %c0_37] : memref<64x384xf32, #tpu.memory_space<vmem>>, vector<8x384xf32>
    %120 = arith.truncf %113 : vector<8x128xf32> to vector<8x128xbf16>
    %c0_38 = arith.constant 0 : index
    %c0_39 = arith.constant 0 : index
    %121 = vector.load %arg10[%c0_38, %c0_39] : memref<128x384xbf16, #tpu.memory_space<vmem>>, vector<128x384xbf16>
    %cst_40 = arith.constant dense<0.000000e+00> : vector<8x384xf32>
    %122 = tpu.matmul %120, %121, %cst_40 {dimension_numbers = #tpu.dot_dimension_numbers<[1], [0], [0], [1], [0, 0, 1, 1], [], []>} : vector<8x128xbf16>, vector<128x384xbf16>, vector<8x384xf32> -> vector<8x384xf32>
    %123 = vector.extract_strided_slice %119 {offsets = [0, 0], sizes = [8, 128], strides = [1, 1]} : vector<8x384xf32> to vector<8x128xf32>
    %124 = vector.extract_strided_slice %122 {offsets = [0, 0], sizes = [8, 128], strides = [1, 1]} : vector<8x384xf32> to vector<8x128xf32>
    %125 = arith.addf %123, %124 : vector<8x128xf32>
    %126 = arith.negf %125 : vector<8x128xf32>
    %127 = math.exp %126 : vector<8x128xf32>
    %cst_41 = arith.constant 1.000000e+00 : f32
    %128 = vector.broadcast %cst_41 : f32 to vector<8x128xf32>
    %129 = arith.addf %128, %127 : vector<8x128xf32>
    %130 = arith.divf %128, %129 : vector<8x128xf32>
    %131 = vector.extract_strided_slice %119 {offsets = [0, 128], sizes = [8, 128], strides = [1, 1]} : vector<8x384xf32> to vector<8x128xf32>
    %132 = vector.extract_strided_slice %122 {offsets = [0, 128], sizes = [8, 128], strides = [1, 1]} : vector<8x384xf32> to vector<8x128xf32>
    %133 = arith.addf %131, %132 : vector<8x128xf32>
    %134 = arith.negf %133 : vector<8x128xf32>
    %135 = math.exp %134 : vector<8x128xf32>
    %cst_42 = arith.constant 1.000000e+00 : f32
    %136 = vector.broadcast %cst_42 : f32 to vector<8x128xf32>
    %137 = arith.addf %136, %135 : vector<8x128xf32>
    %138 = arith.divf %136, %137 : vector<8x128xf32>
    %139 = vector.extract_strided_slice %119 {offsets = [0, 256], sizes = [8, 128], strides = [1, 1]} : vector<8x384xf32> to vector<8x128xf32>
    %140 = vector.extract_strided_slice %122 {offsets = [0, 256], sizes = [8, 128], strides = [1, 1]} : vector<8x384xf32> to vector<8x128xf32>
    %141 = arith.addf %140, %12 : vector<8x128xf32>
    %142 = arith.mulf %130, %141 : vector<8x128xf32>
    %143 = arith.addf %139, %142 : vector<8x128xf32>
    %144 = math.tanh %143 : vector<8x128xf32>
    %145 = arith.subf %113, %144 : vector<8x128xf32>
    %146 = arith.mulf %138, %145 : vector<8x128xf32>
    %147 = arith.addf %144, %146 : vector<8x128xf32>
    %148 = arith.index_cast %117 : i32 to index
    %c0_43 = arith.constant 0 : index
    %149 = vector.load %arg14[%148, %c0_43] : memref<64x384xf32, #tpu.memory_space<vmem>>, vector<8x128xf32>
    tpu.vector_store %arg14[%148, %c0_43], %147 {strides = array<i32>} : memref<64x384xf32, #tpu.memory_space<vmem>>, vector<8x128xf32>,
    %c4_i32 = arith.constant 4 : i32
    %c8_i32_44 = arith.constant 8 : i32
    %150 = arith.muli %c4_i32, %c8_i32_44 : i32
    %151 = tpu.assume_multiple %150, 8 : i32
    %152 = arith.index_cast %151 : i32 to index
    %c0_45 = arith.constant 0 : index
    %153 = vector.load %arg14[%152, %c0_45] : memref<64x384xf32, #tpu.memory_space<vmem>>, vector<8x384xf32>
    %154 = arith.truncf %147 : vector<8x128xf32> to vector<8x128xbf16>
    %c0_46 = arith.constant 0 : index
    %c0_47 = arith.constant 0 : index
    %155 = vector.load %arg10[%c0_46, %c0_47] : memref<128x384xbf16, #tpu.memory_space<vmem>>, vector<128x384xbf16>
    %cst_48 = arith.constant dense<0.000000e+00> : vector<8x384xf32>
    %156 = tpu.matmul %154, %155, %cst_48 {dimension_numbers = #tpu.dot_dimension_numbers<[1], [0], [0], [1], [0, 0, 1, 1], [], []>} : vector<8x128xbf16>, vector<128x384xbf16>, vector<8x384xf32> -> vector<8x384xf32>
    %157 = vector.extract_strided_slice %153 {offsets = [0, 0], sizes = [8, 128], strides = [1, 1]} : vector<8x384xf32> to vector<8x128xf32>
    %158 = vector.extract_strided_slice %156 {offsets = [0, 0], sizes = [8, 128], strides = [1, 1]} : vector<8x384xf32> to vector<8x128xf32>
    %159 = arith.addf %157, %158 : vector<8x128xf32>
    %160 = arith.negf %159 : vector<8x128xf32>
    %161 = math.exp %160 : vector<8x128xf32>
    %cst_49 = arith.constant 1.000000e+00 : f32
    %162 = vector.broadcast %cst_49 : f32 to vector<8x128xf32>
    %163 = arith.addf %162, %161 : vector<8x128xf32>
    %164 = arith.divf %162, %163 : vector<8x128xf32>
    %165 = vector.extract_strided_slice %153 {offsets = [0, 128], sizes = [8, 128], strides = [1, 1]} : vector<8x384xf32> to vector<8x128xf32>
    %166 = vector.extract_strided_slice %156 {offsets = [0, 128], sizes = [8, 128], strides = [1, 1]} : vector<8x384xf32> to vector<8x128xf32>
    %167 = arith.addf %165, %166 : vector<8x128xf32>
    %168 = arith.negf %167 : vector<8x128xf32>
    %169 = math.exp %168 : vector<8x128xf32>
    %cst_50 = arith.constant 1.000000e+00 : f32
    %170 = vector.broadcast %cst_50 : f32 to vector<8x128xf32>
    %171 = arith.addf %170, %169 : vector<8x128xf32>
    %172 = arith.divf %170, %171 : vector<8x128xf32>
    %173 = vector.extract_strided_slice %153 {offsets = [0, 256], sizes = [8, 128], strides = [1, 1]} : vector<8x384xf32> to vector<8x128xf32>
    %174 = vector.extract_strided_slice %156 {offsets = [0, 256], sizes = [8, 128], strides = [1, 1]} : vector<8x384xf32> to vector<8x128xf32>
    %175 = arith.addf %174, %12 : vector<8x128xf32>
    %176 = arith.mulf %164, %175 : vector<8x128xf32>
    %177 = arith.addf %173, %176 : vector<8x128xf32>
    %178 = math.tanh %177 : vector<8x128xf32>
    %179 = arith.subf %147, %178 : vector<8x128xf32>
    %180 = arith.mulf %172, %179 : vector<8x128xf32>
    %181 = arith.addf %178, %180 : vector<8x128xf32>
    %182 = arith.index_cast %151 : i32 to index
    %c0_51 = arith.constant 0 : index
    %183 = vector.load %arg14[%182, %c0_51] : memref<64x384xf32, #tpu.memory_space<vmem>>, vector<8x128xf32>
    tpu.vector_store %arg14[%182, %c0_51], %181 {strides = array<i32>} : memref<64x384xf32, #tpu.memory_space<vmem>>, vector<8x128xf32>,
    %c5_i32 = arith.constant 5 : i32
    %c8_i32_52 = arith.constant 8 : i32
    %184 = arith.muli %c5_i32, %c8_i32_52 : i32
    %185 = tpu.assume_multiple %184, 8 : i32
    %186 = arith.index_cast %185 : i32 to index
    %c0_53 = arith.constant 0 : index
    %187 = vector.load %arg14[%186, %c0_53] : memref<64x384xf32, #tpu.memory_space<vmem>>, vector<8x384xf32>
    %188 = arith.truncf %181 : vector<8x128xf32> to vector<8x128xbf16>
    %c0_54 = arith.constant 0 : index
    %c0_55 = arith.constant 0 : index
    %189 = vector.load %arg10[%c0_54, %c0_55] : memref<128x384xbf16, #tpu.memory_space<vmem>>, vector<128x384xbf16>
    %cst_56 = arith.constant dense<0.000000e+00> : vector<8x384xf32>
    %190 = tpu.matmul %188, %189, %cst_56 {dimension_numbers = #tpu.dot_dimension_numbers<[1], [0], [0], [1], [0, 0, 1, 1], [], []>} : vector<8x128xbf16>, vector<128x384xbf16>, vector<8x384xf32> -> vector<8x384xf32>
    %191 = vector.extract_strided_slice %187 {offsets = [0, 0], sizes = [8, 128], strides = [1, 1]} : vector<8x384xf32> to vector<8x128xf32>
    %192 = vector.extract_strided_slice %190 {offsets = [0, 0], sizes = [8, 128], strides = [1, 1]} : vector<8x384xf32> to vector<8x128xf32>
    %193 = arith.addf %191, %192 : vector<8x128xf32>
    %194 = arith.negf %193 : vector<8x128xf32>
    %195 = math.exp %194 : vector<8x128xf32>
    %cst_57 = arith.constant 1.000000e+00 : f32
    %196 = vector.broadcast %cst_57 : f32 to vector<8x128xf32>
    %197 = arith.addf %196, %195 : vector<8x128xf32>
    %198 = arith.divf %196, %197 : vector<8x128xf32>
    %199 = vector.extract_strided_slice %187 {offsets = [0, 128], sizes = [8, 128], strides = [1, 1]} : vector<8x384xf32> to vector<8x128xf32>
    %200 = vector.extract_strided_slice %190 {offsets = [0, 128], sizes = [8, 128], strides = [1, 1]} : vector<8x384xf32> to vector<8x128xf32>
    %201 = arith.addf %199, %200 : vector<8x128xf32>
    %202 = arith.negf %201 : vector<8x128xf32>
    %203 = math.exp %202 : vector<8x128xf32>
    %cst_58 = arith.constant 1.000000e+00 : f32
    %204 = vector.broadcast %cst_58 : f32 to vector<8x128xf32>
    %205 = arith.addf %204, %203 : vector<8x128xf32>
    %206 = arith.divf %204, %205 : vector<8x128xf32>
    %207 = vector.extract_strided_slice %187 {offsets = [0, 256], sizes = [8, 128], strides = [1, 1]} : vector<8x384xf32> to vector<8x128xf32>
    %208 = vector.extract_strided_slice %190 {offsets = [0, 256], sizes = [8, 128], strides = [1, 1]} : vector<8x384xf32> to vector<8x128xf32>
    %209 = arith.addf %208, %12 : vector<8x128xf32>
    %210 = arith.mulf %198, %209 : vector<8x128xf32>
    %211 = arith.addf %207, %210 : vector<8x128xf32>
    %212 = math.tanh %211 : vector<8x128xf32>
    %213 = arith.subf %181, %212 : vector<8x128xf32>
    %214 = arith.mulf %206, %213 : vector<8x128xf32>
    %215 = arith.addf %212, %214 : vector<8x128xf32>
    %216 = arith.index_cast %185 : i32 to index
    %c0_59 = arith.constant 0 : index
    %217 = vector.load %arg14[%216, %c0_59] : memref<64x384xf32, #tpu.memory_space<vmem>>, vector<8x128xf32>
    tpu.vector_store %arg14[%216, %c0_59], %215 {strides = array<i32>} : memref<64x384xf32, #tpu.memory_space<vmem>>, vector<8x128xf32>,
    %c6_i32 = arith.constant 6 : i32
    %c8_i32_60 = arith.constant 8 : i32
    %218 = arith.muli %c6_i32, %c8_i32_60 : i32
    %219 = tpu.assume_multiple %218, 8 : i32
    %220 = arith.index_cast %219 : i32 to index
    %c0_61 = arith.constant 0 : index
    %221 = vector.load %arg14[%220, %c0_61] : memref<64x384xf32, #tpu.memory_space<vmem>>, vector<8x384xf32>
    %222 = arith.truncf %215 : vector<8x128xf32> to vector<8x128xbf16>
    %c0_62 = arith.constant 0 : index
    %c0_63 = arith.constant 0 : index
    %223 = vector.load %arg10[%c0_62, %c0_63] : memref<128x384xbf16, #tpu.memory_space<vmem>>, vector<128x384xbf16>
    %cst_64 = arith.constant dense<0.000000e+00> : vector<8x384xf32>
    %224 = tpu.matmul %222, %223, %cst_64 {dimension_numbers = #tpu.dot_dimension_numbers<[1], [0], [0], [1], [0, 0, 1, 1], [], []>} : vector<8x128xbf16>, vector<128x384xbf16>, vector<8x384xf32> -> vector<8x384xf32>
    %225 = vector.extract_strided_slice %221 {offsets = [0, 0], sizes = [8, 128], strides = [1, 1]} : vector<8x384xf32> to vector<8x128xf32>
    %226 = vector.extract_strided_slice %224 {offsets = [0, 0], sizes = [8, 128], strides = [1, 1]} : vector<8x384xf32> to vector<8x128xf32>
    %227 = arith.addf %225, %226 : vector<8x128xf32>
    %228 = arith.negf %227 : vector<8x128xf32>
    %229 = math.exp %228 : vector<8x128xf32>
    %cst_65 = arith.constant 1.000000e+00 : f32
    %230 = vector.broadcast %cst_65 : f32 to vector<8x128xf32>
    %231 = arith.addf %230, %229 : vector<8x128xf32>
    %232 = arith.divf %230, %231 : vector<8x128xf32>
    %233 = vector.extract_strided_slice %221 {offsets = [0, 128], sizes = [8, 128], strides = [1, 1]} : vector<8x384xf32> to vector<8x128xf32>
    %234 = vector.extract_strided_slice %224 {offsets = [0, 128], sizes = [8, 128], strides = [1, 1]} : vector<8x384xf32> to vector<8x128xf32>
    %235 = arith.addf %233, %234 : vector<8x128xf32>
    %236 = arith.negf %235 : vector<8x128xf32>
    %237 = math.exp %236 : vector<8x128xf32>
    %cst_66 = arith.constant 1.000000e+00 : f32
    %238 = vector.broadcast %cst_66 : f32 to vector<8x128xf32>
    %239 = arith.addf %238, %237 : vector<8x128xf32>
    %240 = arith.divf %238, %239 : vector<8x128xf32>
    %241 = vector.extract_strided_slice %221 {offsets = [0, 256], sizes = [8, 128], strides = [1, 1]} : vector<8x384xf32> to vector<8x128xf32>
    %242 = vector.extract_strided_slice %224 {offsets = [0, 256], sizes = [8, 128], strides = [1, 1]} : vector<8x384xf32> to vector<8x128xf32>
    %243 = arith.addf %242, %12 : vector<8x128xf32>
    %244 = arith.mulf %232, %243 : vector<8x128xf32>
    %245 = arith.addf %241, %244 : vector<8x128xf32>
    %246 = math.tanh %245 : vector<8x128xf32>
    %247 = arith.subf %215, %246 : vector<8x128xf32>
    %248 = arith.mulf %240, %247 : vector<8x128xf32>
    %249 = arith.addf %246, %248 : vector<8x128xf32>
    %250 = arith.index_cast %219 : i32 to index
    %c0_67 = arith.constant 0 : index
    %251 = vector.load %arg14[%250, %c0_67] : memref<64x384xf32, #tpu.memory_space<vmem>>, vector<8x128xf32>
    tpu.vector_store %arg14[%250, %c0_67], %249 {strides = array<i32>} : memref<64x384xf32, #tpu.memory_space<vmem>>, vector<8x128xf32>,
    %c7_i32 = arith.constant 7 : i32
    %c8_i32_68 = arith.constant 8 : i32
    %252 = arith.muli %c7_i32, %c8_i32_68 : i32
    %253 = tpu.assume_multiple %252, 8 : i32
    %254 = arith.index_cast %253 : i32 to index
    %c0_69 = arith.constant 0 : index
    %255 = vector.load %arg14[%254, %c0_69] : memref<64x384xf32, #tpu.memory_space<vmem>>, vector<8x384xf32>
    %256 = arith.truncf %249 : vector<8x128xf32> to vector<8x128xbf16>
    %c0_70 = arith.constant 0 : index
    %c0_71 = arith.constant 0 : index
    %257 = vector.load %arg10[%c0_70, %c0_71] : memref<128x384xbf16, #tpu.memory_space<vmem>>, vector<128x384xbf16>
    %cst_72 = arith.constant dense<0.000000e+00> : vector<8x384xf32>
    %258 = tpu.matmul %256, %257, %cst_72 {dimension_numbers = #tpu.dot_dimension_numbers<[1], [0], [0], [1], [0, 0, 1, 1], [], []>} : vector<8x128xbf16>, vector<128x384xbf16>, vector<8x384xf32> -> vector<8x384xf32>
    %259 = vector.extract_strided_slice %255 {offsets = [0, 0], sizes = [8, 128], strides = [1, 1]} : vector<8x384xf32> to vector<8x128xf32>
    %260 = vector.extract_strided_slice %258 {offsets = [0, 0], sizes = [8, 128], strides = [1, 1]} : vector<8x384xf32> to vector<8x128xf32>
    %261 = arith.addf %259, %260 : vector<8x128xf32>
    %262 = arith.negf %261 : vector<8x128xf32>
    %263 = math.exp %262 : vector<8x128xf32>
    %cst_73 = arith.constant 1.000000e+00 : f32
    %264 = vector.broadcast %cst_73 : f32 to vector<8x128xf32>
    %265 = arith.addf %264, %263 : vector<8x128xf32>
    %266 = arith.divf %264, %265 : vector<8x128xf32>
    %267 = vector.extract_strided_slice %255 {offsets = [0, 128], sizes = [8, 128], strides = [1, 1]} : vector<8x384xf32> to vector<8x128xf32>
    %268 = vector.extract_strided_slice %258 {offsets = [0, 128], sizes = [8, 128], strides = [1, 1]} : vector<8x384xf32> to vector<8x128xf32>
    %269 = arith.addf %267, %268 : vector<8x128xf32>
    %270 = arith.negf %269 : vector<8x128xf32>
    %271 = math.exp %270 : vector<8x128xf32>
    %cst_74 = arith.constant 1.000000e+00 : f32
    %272 = vector.broadcast %cst_74 : f32 to vector<8x128xf32>
    %273 = arith.addf %272, %271 : vector<8x128xf32>
    %274 = arith.divf %272, %273 : vector<8x128xf32>
    %275 = vector.extract_strided_slice %255 {offsets = [0, 256], sizes = [8, 128], strides = [1, 1]} : vector<8x384xf32> to vector<8x128xf32>
    %276 = vector.extract_strided_slice %258 {offsets = [0, 256], sizes = [8, 128], strides = [1, 1]} : vector<8x384xf32> to vector<8x128xf32>
    %277 = arith.addf %276, %12 : vector<8x128xf32>
    %278 = arith.mulf %266, %277 : vector<8x128xf32>
    %279 = arith.addf %275, %278 : vector<8x128xf32>
    %280 = math.tanh %279 : vector<8x128xf32>
    %281 = arith.subf %249, %280 : vector<8x128xf32>
    %282 = arith.mulf %274, %281 : vector<8x128xf32>
    %283 = arith.addf %280, %282 : vector<8x128xf32>
    %284 = arith.index_cast %253 : i32 to index
    %c0_75 = arith.constant 0 : index
    %285 = vector.load %arg14[%284, %c0_75] : memref<64x384xf32, #tpu.memory_space<vmem>>, vector<8x128xf32>
    tpu.vector_store %arg14[%284, %c0_75], %283 {strides = array<i32>} : memref<64x384xf32, #tpu.memory_space<vmem>>, vector<8x128xf32>,
    %c8_i32_76 = arith.constant 8 : i32
    %c0_77 = arith.constant 0 : index
    %c0_78 = arith.constant 0 : index
    %286 = vector.load %arg13[%c0_77, %c0_78] : memref<8x128xf32, #tpu.memory_space<vmem>>, vector<8x128xf32>
    tpu.vector_store %arg13[%c0_77, %c0_78], %283 {strides = array<i32>} : memref<8x128xf32, #tpu.memory_space<vmem>>, vector<8x128xf32>,
    %c0_79 = arith.constant 0 : index
    %c0_80 = arith.constant 0 : index
    %287 = vector.load %arg14[%c0_79, %c0_80] : memref<64x384xf32, #tpu.memory_space<vmem>>, vector<64x128xf32>
    %cst_81 = arith.constant 0.000000e+00 : f32
    %288 = vector.broadcast %cst_81 : f32 to vector<64x128xf32>
    %289 = arith.maximumf %287, %288 : vector<64x128xf32>
    %290 = arith.truncf %289 : vector<64x128xf32> to vector<64x128xbf16>
    %c0_82 = arith.constant 0 : index
    %c0_83 = arith.constant 0 : index
    %291 = vector.load %arg11[%c0_82, %c0_83] : memref<128x128xbf16, #tpu.memory_space<vmem>>, vector<128x128xbf16>
    %cst_84 = arith.constant dense<0.000000e+00> : vector<64x128xf32>
    %292 = tpu.matmul %290, %291, %cst_84 {dimension_numbers = #tpu.dot_dimension_numbers<[1], [0], [0], [1], [0, 0, 1, 1], [], []>} : vector<64x128xbf16>, vector<128x128xbf16>, vector<64x128xf32> -> vector<64x128xf32>
    %c0_85 = arith.constant 0 : index
    %c0_86 = arith.constant 0 : index
    %293 = vector.load %arg7[%c0_85, %c0_86] : memref<1x128xf32, #tpu.memory_space<vmem>>, vector<1x128xf32>
    %294 = vector.broadcast %293 : vector<1x128xf32> to vector<64x128xf32>
    %295 = arith.addf %292, %294 : vector<64x128xf32>
    %c0_87 = arith.constant 0 : index
    %c0_88 = arith.constant 0 : index
    %296 = vector.load %arg8[%c0_87, %c0_88] : memref<64x128xf32, #tpu.memory_space<vmem>>, vector<64x128xf32>
    tpu.vector_store %arg8[%c0_87, %c0_88], %295 {strides = array<i32>} : memref<64x128xf32, #tpu.memory_space<vmem>>, vector<64x128xf32>,
    return
  }
  func.func @transform_0(%arg0: i32) -> (i32, i32) {
    %c0_i32 = arith.constant 0 : i32
    %c0_i32_0 = arith.constant 0 : i32
    return %arg0, %c0_i32 : i32, i32
  }
  func.func @transform_4(%arg0: i32) -> (i32, i32) {
    %c0_i32 = arith.constant 0 : i32
    %c0_i32_0 = arith.constant 0 : i32
    %c0_i32_1 = arith.constant 0 : i32
    return %c0_i32, %c0_i32_0 : i32, i32
  }
  func.func @transform_5(%arg0: i32) -> (i32, i32) {
    %c0_i32 = arith.constant 0 : i32
    %c0_i32_0 = arith.constant 0 : i32
    %c0_i32_1 = arith.constant 0 : i32
    return %c0_i32, %c0_i32_0 : i32, i32
  }
  func.func @transform_6(%arg0: i32) -> (i32, i32) {
    %c0_i32 = arith.constant 0 : i32
    %c0_i32_0 = arith.constant 0 : i32
    %c0_i32_1 = arith.constant 0 : i32
    return %c0_i32, %c0_i32_0 : i32, i32
  }
  func.func @transform_7(%arg0: i32) -> (i32, i32) {
    %c0_i32 = arith.constant 0 : i32
    %c0_i32_0 = arith.constant 0 : i32
    return %arg0, %c0_i32 : i32, i32
  }
}

</mosaic_0001>

<llo_original>
// kernel: tpu_custom_call.1
$region0: #{tpu_custom_call.1}
  #allocation0 [shape = 'u32[]', space=smem, size = 0x4, offset = 0x4, fixed_abs, tag = 'smem constant byte address 0x4 - core index']
  #allocation1 [shape = 'u32[72,128]{1,0:T(1,128)}', space=vmem, size = 0x9000, scoped, tag = 'internal scratch']
  #allocation2 [shape = 'bf16[128,384]{1,0:T(8,128)(2,1)}', space=vmem, size = 0x18000, scoped, tag = 'scratch operand']
  #allocation3 [shape = 'bf16[128,384]{1,0:T(8,128)(2,1)}', space=vmem, size = 0x18000, scoped, tag = 'scratch operand']
  #allocation4 [shape = 'bf16[128,128]{1,0:T(8,128)(2,1)}', space=vmem, size = 0x8000, scoped, tag = 'scratch operand']
  #allocation5 [shape = 's32[3]{0}', space=sflag, size = 0xc, scoped, tag = 'scratch operand']
  #allocation6 [shape = 'f32[8,128]{1,0:T(8,128)}', space=vmem, size = 0x1000, scoped, tag = 'scratch operand']
  #allocation7 [shape = 'f32[64,384]{1,0:T(8,128)}', space=vmem, size = 0x18000, scoped, tag = 'scratch operand']
  #allocation12 [shape = 's32[]', space=sflag, size = 0x4, offset = 0, fixed_abs, tag = 'sflag constant byte address 0x0 - dummy sync flag']
  #allocation13 [shape = 's32[]', space=sflag, size = 0x4, offset = 0, fixed_abs, tag = 'sflag constant byte address 0x0 - dummy sync flag']
  #allocation14 [shape = 'u32[]', space=smem, size = 0x4, offset = 0x44, fixed_abs, tag = 'smem constant byte address 0x44 - assertion arg 0']
  #allocation15 [shape = 'u32[]', space=smem, size = 0x4, offset = 0x48, fixed_abs, tag = 'smem constant byte address 0x48 - assertion arg 1']
  #allocation16 [shape = 's32[]', space=sflag, size = 0x4, offset = 0, fixed_abs, tag = 'sflag constant byte address 0x0 - dummy sync flag']
  #allocation17 [shape = 's32[]', space=sflag, size = 0x4, offset = 0, fixed_abs, tag = 'sflag constant byte address 0x0 - dummy sync flag']
  #allocation18 [shape = 's32[]', space=sflag, size = 0x4, offset = 0, fixed_abs, tag = 'sflag constant byte address 0x0 - dummy sync flag']
  #allocation19 [shape = 's32[]', space=sflag, size = 0x4, offset = 0, fixed_abs, tag = 'sflag constant byte address 0x0 - dummy sync flag']
  %s0 = inlined_call_operand.hbm [shape: bf16[64,128], index: 0, kind: input, shape index: {}]
  %s1 = inlined_call_operand.hbm [shape: bf16[128,384], index: 1, kind: input, shape index: {}]
  %s2 = inlined_call_operand.hbm [shape: bf16[128,384], index: 2, kind: input, shape index: {}]
  %s3 = inlined_call_operand.hbm [shape: bf16[128,128], index: 3, kind: input, shape index: {}]
  %s4 = inlined_call_operand.vmem [shape: f32[1,384], index: 4, kind: input, shape index: {}]
  %s5 = inlined_call_operand.vmem [shape: f32[1,128], index: 5, kind: input, shape index: {}]
  %s6 = inlined_call_operand.vmem [shape: f32[1,128], index: 6, kind: input, shape index: {}]
  %s7 = inlined_call_operand.hbm [shape: f32[64,128], index: 7, kind: output, shape index: {}]
  %s8 = sld [smem:[#allocation0]]
  $region46: #{tpu_custom_call.1} parent=0
    _
  %s10 = ssub.s32 1, %s8
  %s11 = scalar_select 0, %s10, %s8
  $region1: #{tpu_custom_call.1} parent=0
    #allocation8 [shape = 'u8[16384]{0}', space=vmem, size = 0x4000, scoped, tag = 'input window, operand 0, single buffered']
    #allocation9 [shape = 's32[1]{0}', space=sflag, size = 0x4, scoped, tag = 'scoped memory for tpu_custom_call.1']
    #allocation10 [shape = 's32[1]{0}', space=sflag, size = 0x4, scoped, tag = 'scoped memory for tpu_custom_call.1']
    #allocation11 [shape = 'u8[32768]{0}', space=vmem, size = 0x8000, scoped, tag = 'output window, operand 0, single buffered']
    %12 = vsyncpa [#allocation9], 0
    %13 = vsyncpa [#allocation10], 0
    // Predicated region
    $region2: #{tpu_custom_call.1} parent=1 // pred_check
      _
    $region3: #{tpu_custom_call.1} parent=1 // pred_check_branch
      %15 = sbr.rel (0) target = $region5
    $region4: #{tpu_custom_call.1} parent=1 // pred_region
      %17 = vsyncadd [#allocation9], 0
      %s18 = sshll.u32 %s0, 4
      %s19 = int_to_ptr.hbm [resolvable:$true] %s18
      %s20 = sshll.u32 [#allocation8], 4
      %s21 = int_to_ptr.vmem [resolvable:$true] %s20
      %26 = dma.hbm_to_vmem [thread:$0]  %s19, 512, %s21, [#allocation9], 64, 64, 4
    $region5: #{tpu_custom_call.1} parent=1 // pred_fallthru
      _
    // Predicated region
    $region6: #{tpu_custom_call.1} parent=1 // pred_check
      _
    $region7: #{tpu_custom_call.1} parent=1 // pred_check_branch
      %28 = sbr.rel (0) target = $region9
    $region8: #{tpu_custom_call.1} parent=1 // pred_region
      _
    $region9: #{tpu_custom_call.1} parent=1 // pred_fallthru
      _
    // Predicated region
    $region10: #{tpu_custom_call.1} parent=1 // pred_check
      _
    $region11: #{tpu_custom_call.1} parent=1 // pred_check_branch
      %30 = sbr.rel (0) target = $region13
    $region12: #{tpu_custom_call.1} parent=1 // pred_region
      _
    $region13: #{tpu_custom_call.1} parent=1 // pred_fallthru
      _
    // Predicated region
    $region14: #{tpu_custom_call.1} parent=1 // pred_check
      _
    $region15: #{tpu_custom_call.1} parent=1 // pred_check_branch
      %32 = sbr.rel (0) target = $region17
    $region16: #{tpu_custom_call.1} parent=1 // pred_region
      _
    $region17: #{tpu_custom_call.1} parent=1 // pred_fallthru
      _
    // Predicated region
    $region18: #{tpu_custom_call.1} parent=1 // pred_check
      _
    $region19: #{tpu_custom_call.1} parent=1 // pred_check_branch
      %34 = sbr.rel (0) target = $region21
    $region20: #{tpu_custom_call.1} parent=1 // pred_region
      %36 = dma.done [#allocation9], 512
    $region21: #{tpu_custom_call.1} parent=1 // pred_fallthru
      _
    %p37 = scmp.eq.s32.totalorder 0, 0
    // Predicated region
    $region22: #{tpu_custom_call.1} parent=1 // pred_check
      %p38 = pneg %p37
    $region23: #{tpu_custom_call.1} parent=1 // pred_check_branch
      %40 = sbr.rel (%p38) target = $region25
    $region24: #{tpu_custom_call.1} parent=1 // pred_region
      // Predicated region
      $region26: #{tpu_custom_call.1} parent=24 // pred_check
        _
      $region27: #{tpu_custom_call.1} parent=24 // pred_check_branch
        %42 = sbr.rel target = $region29
      $region28: #{tpu_custom_call.1} parent=24 // pred_region
        %43 = sst [smem:[#allocation14]] [#allocation13]
        %44 = sst [smem:[#allocation15]] [#allocation12]
      $region29: #{tpu_custom_call.1} parent=24 // pred_fallthru
        _
      %46 = shalt.err (0)
      %s48 = sshll.u32 %s1, 4
      %s49 = int_to_ptr.hbm [resolvable:$true] %s48
      %s50 = sshll.u32 [#allocation2], 4
      %s51 = int_to_ptr.vmem [resolvable:$true] %s50
      %53 = dma.hbm_to_vmem [thread:$0]  %s49, 3072, %s51, [#allocation5]
      %s54 = scalar_lea.sflag [#allocation5], 1
      // Predicated region
      $region30: #{tpu_custom_call.1} parent=24 // pred_check
        _
      $region31: #{tpu_custom_call.1} parent=24 // pred_check_branch
        %56 = sbr.rel target = $region33
      $region32: #{tpu_custom_call.1} parent=24 // pred_region
        %57 = sst [smem:[#allocation14]] [#allocation17]
        %58 = sst [smem:[#allocation15]] [#allocation16]
      $region33: #{tpu_custom_call.1} parent=24 // pred_fallthru
        _
      %60 = shalt.err (0)
      %s62 = sshll.u32 %s2, 4
      %s63 = int_to_ptr.hbm [resolvable:$true] %s62
      %s64 = sshll.u32 [#allocation3], 4
      %s65 = int_to_ptr.vmem [resolvable:$true] %s64
      %67 = dma.hbm_to_vmem [thread:$0]  %s63, 3072, %s65, %s54
      %s68 = scalar_lea.sflag [#allocation5], 2
      // Predicated region
      $region34: #{tpu_custom_call.1} parent=24 // pred_check
        _
      $region35: #{tpu_custom_call.1} parent=24 // pred_check_branch
        %70 = sbr.rel target = $region37
      $region36: #{tpu_custom_call.1} parent=24 // pred_region
        %71 = sst [smem:[#allocation14]] [#allocation19]
        %72 = sst [smem:[#allocation15]] [#allocation18]
      $region37: #{tpu_custom_call.1} parent=24 // pred_fallthru
        _
      %74 = shalt.err (0)
      %s76 = sshll.u32 %s3, 4
      %s77 = int_to_ptr.hbm [resolvable:$true] %s76
      %s78 = sshll.u32 [#allocation4], 4
      %s79 = int_to_ptr.vmem [resolvable:$true] %s78
      %81 = dma.hbm_to_vmem [thread:$0]  %s77, 1024, %s79, %s68
      %s82 = smul.u32 4, 16
      %s83 = smul.u32 %s82, 3
      %s84 = sshll.u32 %s83, 4
      %85 = dma.done [#allocation5], %s84
      %s86 = sshll.u32 %s83, 4
      %87 = dma.done %s54, %s86
      %s88 = smul.u32 %s82, 1
      %s89 = sshll.u32 %s88, 4
      %90 = dma.done %s68, %s89
      %91 = vst [vmem:[#allocation6] sm:$0xff] 0.0
    $region25: #{tpu_custom_call.1} parent=1 // pred_fallthru
      _
    %v92 = vld [vmem:[#allocation8] sm:$0xf]
    %v93 = vld [vmem:[#allocation8 + $0x4] sm:$0xf]
    %v94 = vld [vmem:[#allocation8 + $0x8] sm:$0xf]
    %v95 = vld [vmem:[#allocation8 + $0xc] sm:$0xf]
    %v96 = vld [vmem:[#allocation8 + $0x10] sm:$0xf]
    %v97 = vld [vmem:[#allocation8 + $0x14] sm:$0xf]
    %v98 = vld [vmem:[#allocation8 + $0x18] sm:$0xf]
    %v99 = vld [vmem:[#allocation8 + $0x1c] sm:$0xf]
    %v100 = vld [vmem:[#allocation2] sm:$0xff]
    %v101 = vld [vmem:[#allocation2 + $0x8] sm:$0xf]
    %v102 = vld [vmem:[#allocation2 + $0xc] sm:$0xff]
    %v103 = vld [vmem:[#allocation2 + $0x14] sm:$0xf]
    %v104 = vld [vmem:[#allocation2 + $0x18] sm:$0xff]
    %v105 = vld [vmem:[#allocation2 + $0x20] sm:$0xf]
    %v106 = vld [vmem:[#allocation2 + $0x24] sm:$0xff]
    %v107 = vld [vmem:[#allocation2 + $0x2c] sm:$0xf]
    %v108 = vld [vmem:[#allocation2 + $0x30] sm:$0xff]
    %v109 = vld [vmem:[#allocation2 + $0x38] sm:$0xf]
    %v110 = vld [vmem:[#allocation2 + $0x3c] sm:$0xff]
    %v111 = vld [vmem:[#allocation2 + $0x44] sm:$0xf]
    %v112 = vld [vmem:[#allocation2 + $0x48] sm:$0xff]
    %v113 = vld [vmem:[#allocation2 + $0x50] sm:$0xf]
    %v114 = vld [vmem:[#allocation2 + $0x54] sm:$0xff]
    %v115 = vld [vmem:[#allocation2 + $0x5c] sm:$0xf]
    %v116 = vld [vmem:[#allocation2 + $0x60] sm:$0xff]
    %v117 = vld [vmem:[#allocation2 + $0x68] sm:$0xf]
    %v118 = vld [vmem:[#allocation2 + $0x6c] sm:$0xff]
    %v119 = vld [vmem:[#allocation2 + $0x74] sm:$0xf]
    %v120 = vld [vmem:[#allocation2 + $0x78] sm:$0xff]
    %v121 = vld [vmem:[#allocation2 + $0x80] sm:$0xf]
    %v122 = vld [vmem:[#allocation2 + $0x84] sm:$0xff]
    %v123 = vld [vmem:[#allocation2 + $0x8c] sm:$0xf]
    %v124 = vld [vmem:[#allocation2 + $0x90] sm:$0xff]
    %v125 = vld [vmem:[#allocation2 + $0x98] sm:$0xf]
    %v126 = vld [vmem:[#allocation2 + $0x9c] sm:$0xff]
    %v127 = vld [vmem:[#allocation2 + $0xa4] sm:$0xf]
    %v128 = vld [vmem:[#allocation2 + $0xa8] sm:$0xff]
    %v129 = vld [vmem:[#allocation2 + $0xb0] sm:$0xf]
    %v130 = vld [vmem:[#allocation2 + $0xb4] sm:$0xff]
    %v131 = vld [vmem:[#allocation2 + $0xbc] sm:$0xf]
    %v132 = vld [vmem:[%s4] sm:$0x7]
    %v134 = vperm.slane %v132, 0
    %v135 = vperm.slane %v132, 1
    %v136 = vperm.slane %v132, 2
    %v148 = vunpack.c.l.b16 %v92
    %v149 = vunpack.c.l.b16 %v93
    %v150 = vunpack.c.l.b16 %v94
    %v151 = vunpack.c.l.b16 %v95
    %v152 = vunpack.c.l.b16 %v96
    %v153 = vunpack.c.l.b16 %v97
    %v154 = vunpack.c.l.b16 %v98
    %v155 = vunpack.c.l.b16 %v99
    %v156 = vpack.c.b16 %v149, %v148
    %v157 = vpack.c.b16 %v151, %v150
    %v158 = vpack.c.b16 %v153, %v152
    %v159 = vpack.c.b16 %v155, %v154
    %v196 = vunpack.c.l.b16 %v100
    %v197 = vunpack.c.h.b16 %v100
    %v198 = vunpack.c.l.b16 %v101
    %v199 = vunpack.c.l.b16 %v102
    %v200 = vunpack.c.h.b16 %v102
    %v201 = vunpack.c.l.b16 %v103
    %v202 = vunpack.c.l.b16 %v104
    %v203 = vunpack.c.h.b16 %v104
    %v204 = vunpack.c.l.b16 %v105
    %v205 = vunpack.c.l.b16 %v106
    %v206 = vunpack.c.h.b16 %v106
    %v207 = vunpack.c.l.b16 %v107
    %v208 = vunpack.c.l.b16 %v108
    %v209 = vunpack.c.h.b16 %v108
    %v210 = vunpack.c.l.b16 %v109
    %v211 = vunpack.c.l.b16 %v110
    %v212 = vunpack.c.h.b16 %v110
    %v213 = vunpack.c.l.b16 %v111
    %v214 = vunpack.c.l.b16 %v112
    %v215 = vunpack.c.h.b16 %v112
    %v216 = vunpack.c.l.b16 %v113
    %v217 = vunpack.c.l.b16 %v114
    %v218 = vunpack.c.h.b16 %v114
    %v219 = vunpack.c.l.b16 %v115
    %v220 = vunpack.c.l.b16 %v116
    %v221 = vunpack.c.h.b16 %v116
    %v222 = vunpack.c.l.b16 %v117
    %v223 = vunpack.c.l.b16 %v118
    %v224 = vunpack.c.h.b16 %v118
    %v225 = vunpack.c.l.b16 %v119
    %v226 = vunpack.c.l.b16 %v120
    %v227 = vunpack.c.h.b16 %v120
    %v228 = vunpack.c.l.b16 %v121
    %v229 = vunpack.c.l.b16 %v122
    %v230 = vunpack.c.h.b16 %v122
    %v231 = vunpack.c.l.b16 %v123
    %v232 = vunpack.c.l.b16 %v124
    %v233 = vunpack.c.h.b16 %v124
    %v234 = vunpack.c.l.b16 %v125
    %v235 = vunpack.c.l.b16 %v126
    %v236 = vunpack.c.h.b16 %v126
    %v237 = vunpack.c.l.b16 %v127
    %v238 = vunpack.c.l.b16 %v128
    %v239 = vunpack.c.h.b16 %v128
    %v240 = vunpack.c.l.b16 %v129
    %v241 = vunpack.c.l.b16 %v130
    %v242 = vunpack.c.h.b16 %v130
    %v243 = vunpack.c.l.b16 %v131
    %v244 = vpack.c.b16 %v199, %v196
    %v245 = vpack.c.b16 %v200, %v197
    %v246 = vpack.c.b16 %v201, %v198
    %v247 = vpack.c.b16 %v205, %v202
    %v248 = vpack.c.b16 %v206, %v203
    %v249 = vpack.c.b16 %v207, %v204
    %v250 = vpack.c.b16 %v211, %v208
    %v251 = vpack.c.b16 %v212, %v209
    %v252 = vpack.c.b16 %v213, %v210
    %v253 = vpack.c.b16 %v217, %v214
    %v254 = vpack.c.b16 %v218, %v215
    %v255 = vpack.c.b16 %v219, %v216
    %v256 = vpack.c.b16 %v223, %v220
    %v257 = vpack.c.b16 %v224, %v221
    %v258 = vpack.c.b16 %v225, %v222
    %v259 = vpack.c.b16 %v229, %v226
    %v260 = vpack.c.b16 %v230, %v227
    %v261 = vpack.c.b16 %v231, %v228
    %v262 = vpack.c.b16 %v235, %v232
    %v263 = vpack.c.b16 %v236, %v233
    %v264 = vpack.c.b16 %v237, %v234
    %v265 = vpack.c.b16 %v241, %v238
    %v266 = vpack.c.b16 %v242, %v239
    %v267 = vpack.c.b16 %v243, %v240
    %292 = vmatpush.bf16.msra.mxu0 %v265
    %293 = vmatpush.bf16.msra.mxu0 %v262
    %294 = vmatpush.bf16.msra.mxu0 %v259
    %295 = vmatpush.bf16.msra.mxu0 %v256
    %296 = vmatpush.bf16.msra.mxu0 %v253
    %297 = vmatpush.bf16.msra.mxu0 %v250
    %298 = vmatpush.bf16.msra.mxu0 %v247
    %299 = vmatpush.bf16.msra.mxu0 %v244
    %300 = vmatmul.bf16.gmra.mxu0 %v156
    %v301 = vpop.f32.mrf.mxu0
    %v302 = vadd.f32 %v134, %v301
    %v303 = vpop.f32.mrf.mxu0
    %v304 = vadd.f32 %v134, %v303
    %305 = vmatmul.bf16.gmra.mxu0 %v157
    %v306 = vpop.f32.mrf.mxu0
    %v307 = vadd.f32 %v134, %v306
    %v308 = vpop.f32.mrf.mxu0
    %v309 = vadd.f32 %v134, %v308
    %310 = vmatmul.bf16.gmra.mxu0 %v158
    %v311 = vpop.f32.mrf.mxu0
    %v312 = vadd.f32 %v134, %v311
    %v313 = vpop.f32.mrf.mxu0
    %v314 = vadd.f32 %v134, %v313
    %315 = vmatmul.bf16.gmra.mxu0 %v159
    %v316 = vpop.f32.mrf.mxu0
    %v317 = vadd.f32 %v134, %v316
    %v318 = vpop.f32.mrf.mxu0
    %v319 = vadd.f32 %v134, %v318
    %320 = vdwg.mxu0
    %321 = vmatpush.bf16.msra.mxu0 %v266
    %322 = vmatpush.bf16.msra.mxu0 %v263
    %323 = vmatpush.bf16.msra.mxu0 %v260
    %324 = vmatpush.bf16.msra.mxu0 %v257
    %325 = vmatpush.bf16.msra.mxu0 %v254
    %326 = vmatpush.bf16.msra.mxu0 %v251
    %327 = vmatpush.bf16.msra.mxu0 %v248
    %328 = vmatpush.bf16.msra.mxu0 %v245
    %329 = vmatmul.bf16.gmra.mxu0 %v156
    %v330 = vpop.f32.mrf.mxu0
    %v331 = vadd.f32 %v135, %v330
    %v332 = vpop.f32.mrf.mxu0
    %v333 = vadd.f32 %v135, %v332
    %334 = vmatmul.bf16.gmra.mxu0 %v157
    %v335 = vpop.f32.mrf.mxu0
    %v336 = vadd.f32 %v135, %v335
    %v337 = vpop.f32.mrf.mxu0
    %v338 = vadd.f32 %v135, %v337
    %339 = vmatmul.bf16.gmra.mxu0 %v158
    %v340 = vpop.f32.mrf.mxu0
    %v341 = vadd.f32 %v135, %v340
    %v342 = vpop.f32.mrf.mxu0
    %v343 = vadd.f32 %v135, %v342
    %344 = vmatmul.bf16.gmra.mxu0 %v159
    %v345 = vpop.f32.mrf.mxu0
    %v346 = vadd.f32 %v135, %v345
    %v347 = vpop.f32.mrf.mxu0
    %v348 = vadd.f32 %v135, %v347
    %349 = vdwg.mxu0
    %350 = vmatpush.bf16.msra.mxu0 %v267
    %351 = vmatpush.bf16.msra.mxu0 %v264
    %352 = vmatpush.bf16.msra.mxu0 %v261
    %353 = vmatpush.bf16.msra.mxu0 %v258
    %354 = vmatpush.bf16.msra.mxu0 %v255
    %355 = vmatpush.bf16.msra.mxu0 %v252
    %356 = vmatpush.bf16.msra.mxu0 %v249
    %357 = vmatpush.bf16.msra.mxu0 %v246
    %358 = vmatmul.bf16.gmra.mxu0 %v156
    %v359 = vpop.f32.mrf.mxu0
    %v360 = vadd.f32 %v136, %v359
    %v361 = vpop.f32.mrf.mxu0
    %v362 = vadd.f32 %v136, %v361
    %363 = vmatmul.bf16.gmra.mxu0 %v157
    %v364 = vpop.f32.mrf.mxu0
    %v365 = vadd.f32 %v136, %v364
    %v366 = vpop.f32.mrf.mxu0
    %v367 = vadd.f32 %v136, %v366
    %368 = vmatmul.bf16.gmra.mxu0 %v158
    %v369 = vpop.f32.mrf.mxu0
    %v370 = vadd.f32 %v136, %v369
    %v371 = vpop.f32.mrf.mxu0
    %v372 = vadd.f32 %v136, %v371
    %373 = vmatmul.bf16.gmra.mxu0 %v159
    %v374 = vpop.f32.mrf.mxu0
    %v375 = vadd.f32 %v136, %v374
    %v376 = vpop.f32.mrf.mxu0
    %v377 = vadd.f32 %v136, %v376
    %378 = vdwg.mxu0
    %379 = vst [vmem:[#allocation7] sm:$0xff] %v302
    %380 = vst [vmem:[#allocation7 + $0x8] sm:$0xff] %v331
    %381 = vst [vmem:[#allocation7 + $0x10] sm:$0xff] %v360
    %382 = vst [vmem:[#allocation7 + $0x18] sm:$0xff] %v304
    %383 = vst [vmem:[#allocation7 + $0x20] sm:$0xff] %v333
    %384 = vst [vmem:[#allocation7 + $0x28] sm:$0xff] %v362
    %385 = vst [vmem:[#allocation7 + $0x30] sm:$0xff] %v307
    %386 = vst [vmem:[#allocation7 + $0x38] sm:$0xff] %v336
    %387 = vst [vmem:[#allocation7 + $0x40] sm:$0xff] %v365
    %388 = vst [vmem:[#allocation7 + $0x48] sm:$0xff] %v309
    %389 = vst [vmem:[#allocation7 + $0x50] sm:$0xff] %v338
    %390 = vst [vmem:[#allocation7 + $0x58] sm:$0xff] %v367
    %391 = vst [vmem:[#allocation7 + $0x60] sm:$0xff] %v312
    %392 = vst [vmem:[#allocation7 + $0x68] sm:$0xff] %v341
    %393 = vst [vmem:[#allocation7 + $0x70] sm:$0xff] %v370
    %394 = vst [vmem:[#allocation7 + $0x78] sm:$0xff] %v314
    %395 = vst [vmem:[#allocation7 + $0x80] sm:$0xff] %v343
    %396 = vst [vmem:[#allocation7 + $0x88] sm:$0xff] %v372
    %397 = vst [vmem:[#allocation7 + $0x90] sm:$0xff] %v317
    %398 = vst [vmem:[#allocation7 + $0x98] sm:$0xff] %v346
    %399 = vst [vmem:[#allocation7 + $0xa0] sm:$0xff] %v375
    %400 = vst [vmem:[#allocation7 + $0xa8] sm:$0xff] %v319
    %401 = vst [vmem:[#allocation7 + $0xb0] sm:$0xff] %v348
    %402 = vst [vmem:[#allocation7 + $0xb8] sm:$0xff] %v377
    %v403 = vld [vmem:[%s5] sm:$0x1]
    %v405 = vperm.slane %v403, 0
    %v407 = vld [vmem:[#allocation6] sm:$0xff]
    %s408 = smul.u32 0, 3
    %s409 = smul.addr %s408, 8
    %s410 = scalar_lea.vmem [#allocation7], %s409
    %v411 = vld [vmem:[%s410] sm:$0xff]
    %v412 = vld [vmem:[%s410 + $0x8] sm:$0xff]
    %v413 = vld [vmem:[%s410 + $0x10] sm:$0xff]
    %v414 = vpack.c.bf16 %v407, %v407
    %v415 = vld [vmem:[#allocation3] sm:$0xff]
    %v416 = vld [vmem:[#allocation3 + $0x8] sm:$0xf]
    %v417 = vld [vmem:[#allocation3 + $0xc] sm:$0xff]
    %v418 = vld [vmem:[#allocation3 + $0x14] sm:$0xf]
    %v419 = vld [vmem:[#allocation3 + $0x18] sm:$0xff]
    %v420 = vld [vmem:[#allocation3 + $0x20] sm:$0xf]
    %v421 = vld [vmem:[#allocation3 + $0x24] sm:$0xff]
    %v422 = vld [vmem:[#allocation3 + $0x2c] sm:$0xf]
    %v423 = vld [vmem:[#allocation3 + $0x30] sm:$0xff]
    %v424 = vld [vmem:[#allocation3 + $0x38] sm:$0xf]
    %v425 = vld [vmem:[#allocation3 + $0x3c] sm:$0xff]
    %v426 = vld [vmem:[#allocation3 + $0x44] sm:$0xf]
    %v427 = vld [vmem:[#allocation3 + $0x48] sm:$0xff]
    %v428 = vld [vmem:[#allocation3 + $0x50] sm:$0xf]
    %v429 = vld [vmem:[#allocation3 + $0x54] sm:$0xff]
    %v430 = vld [vmem:[#allocation3 + $0x5c] sm:$0xf]
    %v431 = vld [vmem:[#allocation3 + $0x60] sm:$0xff]
    %v432 = vld [vmem:[#allocation3 + $0x68] sm:$0xf]
    %v433 = vld [vmem:[#allocation3 + $0x6c] sm:$0xff]
    %v434 = vld [vmem:[#allocation3 + $0x74] sm:$0xf]
    %v435 = vld [vmem:[#allocation3 + $0x78] sm:$0xff]
    %v436 = vld [vmem:[#allocation3 + $0x80] sm:$0xf]
    %v437 = vld [vmem:[#allocation3 + $0x84] sm:$0xff]
    %v438 = vld [vmem:[#allocation3 + $0x8c] sm:$0xf]
    %v439 = vld [vmem:[#allocation3 + $0x90] sm:$0xff]
    %v440 = vld [vmem:[#allocation3 + $0x98] sm:$0xf]
    %v441 = vld [vmem:[#allocation3 + $0x9c] sm:$0xff]
    %v442 = vld [vmem:[#allocation3 + $0xa4] sm:$0xf]
    %v443 = vld [vmem:[#allocation3 + $0xa8] sm:$0xff]
    %v444 = vld [vmem:[#allocation3 + $0xb0] sm:$0xf]
    %v445 = vld [vmem:[#allocation3 + $0xb4] sm:$0xff]
    %v446 = vld [vmem:[#allocation3 + $0xbc] sm:$0xf]
    %v479 = vunpack.c.l.b16 %v415
    %v480 = vunpack.c.h.b16 %v415
    %v481 = vunpack.c.l.b16 %v416
    %v482 = vunpack.c.l.b16 %v417
    %v483 = vunpack.c.h.b16 %v417
    %v484 = vunpack.c.l.b16 %v418
    %v485 = vunpack.c.l.b16 %v419
    %v486 = vunpack.c.h.b16 %v419
    %v487 = vunpack.c.l.b16 %v420
    %v488 = vunpack.c.l.b16 %v421
    %v489 = vunpack.c.h.b16 %v421
    %v490 = vunpack.c.l.b16 %v422
    %v491 = vunpack.c.l.b16 %v423
    %v492 = vunpack.c.h.b16 %v423
    %v493 = vunpack.c.l.b16 %v424
    %v494 = vunpack.c.l.b16 %v425
    %v495 = vunpack.c.h.b16 %v425
    %v496 = vunpack.c.l.b16 %v426
    %v497 = vunpack.c.l.b16 %v427
    %v498 = vunpack.c.h.b16 %v427
    %v499 = vunpack.c.l.b16 %v428
    %v500 = vunpack.c.l.b16 %v429
    %v501 = vunpack.c.h.b16 %v429
    %v502 = vunpack.c.l.b16 %v430
    %v503 = vunpack.c.l.b16 %v431
    %v504 = vunpack.c.h.b16 %v431
    %v505 = vunpack.c.l.b16 %v432
    %v506 = vunpack.c.l.b16 %v433
    %v507 = vunpack.c.h.b16 %v433
    %v508 = vunpack.c.l.b16 %v434
    %v509 = vunpack.c.l.b16 %v435
    %v510 = vunpack.c.h.b16 %v435
    %v511 = vunpack.c.l.b16 %v436
    %v512 = vunpack.c.l.b16 %v437
    %v513 = vunpack.c.h.b16 %v437
    %v514 = vunpack.c.l.b16 %v438
    %v515 = vunpack.c.l.b16 %v439
    %v516 = vunpack.c.h.b16 %v439
    %v517 = vunpack.c.l.b16 %v440
    %v518 = vunpack.c.l.b16 %v441
    %v519 = vunpack.c.h.b16 %v441
    %v520 = vunpack.c.l.b16 %v442
    %v521 = vunpack.c.l.b16 %v443
    %v522 = vunpack.c.h.b16 %v443
    %v523 = vunpack.c.l.b16 %v444
    %v524 = vunpack.c.l.b16 %v445
    %v525 = vunpack.c.h.b16 %v445
    %v526 = vunpack.c.l.b16 %v446
    %v527 = vpack.c.b16 %v482, %v479
    %v528 = vpack.c.b16 %v483, %v480
    %v529 = vpack.c.b16 %v484, %v481
    %v530 = vpack.c.b16 %v488, %v485
    %v531 = vpack.c.b16 %v489, %v486
    %v532 = vpack.c.b16 %v490, %v487
    %v533 = vpack.c.b16 %v494, %v491
    %v534 = vpack.c.b16 %v495, %v492
    %v535 = vpack.c.b16 %v496, %v493
    %v536 = vpack.c.b16 %v500, %v497
    %v537 = vpack.c.b16 %v501, %v498
    %v538 = vpack.c.b16 %v502, %v499
    %v539 = vpack.c.b16 %v506, %v503
    %v540 = vpack.c.b16 %v507, %v504
    %v541 = vpack.c.b16 %v508, %v505
    %v542 = vpack.c.b16 %v512, %v509
    %v543 = vpack.c.b16 %v513, %v510
    %v544 = vpack.c.b16 %v514, %v511
    %v545 = vpack.c.b16 %v518, %v515
    %v546 = vpack.c.b16 %v519, %v516
    %v547 = vpack.c.b16 %v520, %v517
    %v548 = vpack.c.b16 %v524, %v521
    %v549 = vpack.c.b16 %v525, %v522
    %v550 = vpack.c.b16 %v526, %v523
    %575 = vmatpush.bf16.msra.mxu0 %v548
    %576 = vmatpush.bf16.msra.mxu0 %v545
    %577 = vmatpush.bf16.msra.mxu0 %v542
    %578 = vmatpush.bf16.msra.mxu0 %v539
    %579 = vmatpush.bf16.msra.mxu0 %v536
    %580 = vmatpush.bf16.msra.mxu0 %v533
    %581 = vmatpush.bf16.msra.mxu0 %v530
    %582 = vmatpush.bf16.msra.mxu0 %v527
    %583 = vmatmul.bf16.gmra.mxu0 %v414
    %v584 = vpop.f32.mrf.mxu0
    %v585 = vadd.f32 0.0, %v584
    %v586 = vpop.f32.mrf.mxu0
    %587 = vdwg.mxu0
    %588 = vmatpush.bf16.msra.mxu0 %v549
    %589 = vmatpush.bf16.msra.mxu0 %v546
    %590 = vmatpush.bf16.msra.mxu0 %v543
    %591 = vmatpush.bf16.msra.mxu0 %v540
    %592 = vmatpush.bf16.msra.mxu0 %v537
    %593 = vmatpush.bf16.msra.mxu0 %v534
    %594 = vmatpush.bf16.msra.mxu0 %v531
    %595 = vmatpush.bf16.msra.mxu0 %v528
    %596 = vmatmul.bf16.gmra.mxu0 %v414
    %v597 = vpop.f32.mrf.mxu0
    %v598 = vadd.f32 0.0, %v597
    %v599 = vpop.f32.mrf.mxu0
    %600 = vdwg.mxu0
    %601 = vmatpush.bf16.msra.mxu0 %v550
    %602 = vmatpush.bf16.msra.mxu0 %v547
    %603 = vmatpush.bf16.msra.mxu0 %v544
    %604 = vmatpush.bf16.msra.mxu0 %v541
    %605 = vmatpush.bf16.msra.mxu0 %v538
    %606 = vmatpush.bf16.msra.mxu0 %v535
    %607 = vmatpush.bf16.msra.mxu0 %v532
    %608 = vmatpush.bf16.msra.mxu0 %v529
    %609 = vmatmul.bf16.gmra.mxu0 %v414
    %v610 = vpop.f32.mrf.mxu0
    %v611 = vadd.f32 0.0, %v610
    %v612 = vpop.f32.mrf.mxu0
    %613 = vdwg.mxu0
    %v614 = vadd.f32 %v411, %v585
    %v615 = vxor.u32 %v614, 2147483648
    %v616 = vmul.f32 %v615, 1.442695
    %v617 = vpow.pop %v616
    %v618 = vadd.f32 %v617, 1.0
    %v619 = vrcp.pop %v618
    %v620 = vmul.f32 %v618, %v619
    %v621 = vsub.f32 1.0, %v620
    %v622 = vmul.f32 %v619, %v621
    %v623 = vadd.f32 %v619, %v622
    %vm624 = vweird.f32 %v618
    %vm625 = vweird.f32 %v619
    %vm626 = vmor %vm624, %vm625
    %v627 = vsel %vm626, %v619, %v623
    %v628 = vand.u32 2147483647, %v618
    %vm629 = vcmp.eq.f32.partialorder %v628, 8.507059e+37
    %v630 = vand.u32 %v618, 2147483648
    %v631 = vor.u32 1.1754944e-38, %v630
    %v632 = vsel %vm629, %v631, %v627
    %v633 = vmul.f32 1.0, %v632
    %v634 = vadd.f32 %v412, %v598
    %v635 = vxor.u32 %v634, 2147483648
    %v636 = vmul.f32 %v635, 1.442695
    %v637 = vpow.pop %v636
    %v638 = vadd.f32 %v637, 1.0
    %v639 = vrcp.pop %v638
    %v640 = vmul.f32 %v638, %v639
    %v641 = vsub.f32 1.0, %v640
    %v642 = vmul.f32 %v639, %v641
    %v643 = vadd.f32 %v639, %v642
    %vm644 = vweird.f32 %v638
    %vm645 = vweird.f32 %v639
    %vm646 = vmor %vm644, %vm645
    %v647 = vsel %vm646, %v639, %v643
    %v648 = vand.u32 2147483647, %v638
    %vm649 = vcmp.eq.f32.partialorder %v648, 8.507059e+37
    %v650 = vand.u32 %v638, 2147483648
    %v651 = vor.u32 1.1754944e-38, %v650
    %v652 = vsel %vm649, %v651, %v647
    %v653 = vmul.f32 1.0, %v652
    %v654 = vadd.f32 %v611, %v405
    %v655 = vmul.f32 %v633, %v654
    %v656 = vadd.f32 %v413, %v655
    %v657 = vtanh.pop %v656
    %v658 = vsub.f32 %v407, %v657
    %v659 = vmul.f32 %v653, %v658
    %v660 = vadd.f32 %v657, %v659
    %661 = vst [vmem:[%s410] sm:$0xff] %v660
    %s662 = smul.u32 1, 3
    %s663 = smul.addr %s662, 8
    %s664 = scalar_lea.vmem [#allocation7], %s663
    %v665 = vld [vmem:[%s664] sm:$0xff]
    %v666 = vld [vmem:[%s664 + $0x8] sm:$0xff]
    %v667 = vld [vmem:[%s664 + $0x10] sm:$0xff]
    %v668 = vpack.c.bf16 %v660, %v660
    %v669 = vld [vmem:[#allocation3] sm:$0xff]
    %v670 = vld [vmem:[#allocation3 + $0x8] sm:$0xf]
    %v671 = vld [vmem:[#allocation3 + $0xc] sm:$0xff]
    %v672 = vld [vmem:[#allocation3 + $0x14] sm:$0xf]
    %v673 = vld [vmem:[#allocation3 + $0x18] sm:$0xff]
    %v674 = vld [vmem:[#allocation3 + $0x20] sm:$0xf]
    %v675 = vld [vmem:[#allocation3 + $0x24] sm:$0xff]
    %v676 = vld [vmem:[#allocation3 + $0x2c] sm:$0xf]
    %v677 = vld [vmem:[#allocation3 + $0x30] sm:$0xff]
    %v678 = vld [vmem:[#allocation3 + $0x38] sm:$0xf]
    %v679 = vld [vmem:[#allocation3 + $0x3c] sm:$0xff]
    %v680 = vld [vmem:[#allocation3 + $0x44] sm:$0xf]
    %v681 = vld [vmem:[#allocation3 + $0x48] sm:$0xff]
    %v682 = vld [vmem:[#allocation3 + $0x50] sm:$0xf]
    %v683 = vld [vmem:[#allocation3 + $0x54] sm:$0xff]
    %v684 = vld [vmem:[#allocation3 + $0x5c] sm:$0xf]
    %v685 = vld [vmem:[#allocation3 + $0x60] sm:$0xff]
    %v686 = vld [vmem:[#allocation3 + $0x68] sm:$0xf]
    %v687 = vld [vmem:[#allocation3 + $0x6c] sm:$0xff]
    %v688 = vld [vmem:[#allocation3 + $0x74] sm:$0xf]
    %v689 = vld [vmem:[#allocation3 + $0x78] sm:$0xff]
    %v690 = vld [vmem:[#allocation3 + $0x80] sm:$0xf]
    %v691 = vld [vmem:[#allocation3 + $0x84] sm:$0xff]
    %v692 = vld [vmem:[#allocation3 + $0x8c] sm:$0xf]
    %v693 = vld [vmem:[#allocation3 + $0x90] sm:$0xff]
    %v694 = vld [vmem:[#allocation3 + $0x98] sm:$0xf]
    %v695 = vld [vmem:[#allocation3 + $0x9c] sm:$0xff]
    %v696 = vld [vmem:[#allocation3 + $0xa4] sm:$0xf]
    %v697 = vld [vmem:[#allocation3 + $0xa8] sm:$0xff]
    %v698 = vld [vmem:[#allocation3 + $0xb0] sm:$0xf]
    %v699 = vld [vmem:[#allocation3 + $0xb4] sm:$0xff]
    %v700 = vld [vmem:[#allocation3 + $0xbc] sm:$0xf]
    %v733 = vunpack.c.l.b16 %v669
    %v734 = vunpack.c.h.b16 %v669
    %v735 = vunpack.c.l.b16 %v670
    %v736 = vunpack.c.l.b16 %v671
    %v737 = vunpack.c.h.b16 %v671
    %v738 = vunpack.c.l.b16 %v672
    %v739 = vunpack.c.l.b16 %v673
    %v740 = vunpack.c.h.b16 %v673
    %v741 = vunpack.c.l.b16 %v674
    %v742 = vunpack.c.l.b16 %v675
    %v743 = vunpack.c.h.b16 %v675
    %v744 = vunpack.c.l.b16 %v676
    %v745 = vunpack.c.l.b16 %v677
    %v746 = vunpack.c.h.b16 %v677
    %v747 = vunpack.c.l.b16 %v678
    %v748 = vunpack.c.l.b16 %v679
    %v749 = vunpack.c.h.b16 %v679
    %v750 = vunpack.c.l.b16 %v680
    %v751 = vunpack.c.l.b16 %v681
    %v752 = vunpack.c.h.b16 %v681
    %v753 = vunpack.c.l.b16 %v682
    %v754 = vunpack.c.l.b16 %v683
    %v755 = vunpack.c.h.b16 %v683
    %v756 = vunpack.c.l.b16 %v684
    %v757 = vunpack.c.l.b16 %v685
    %v758 = vunpack.c.h.b16 %v685
    %v759 = vunpack.c.l.b16 %v686
    %v760 = vunpack.c.l.b16 %v687
    %v761 = vunpack.c.h.b16 %v687
    %v762 = vunpack.c.l.b16 %v688
    %v763 = vunpack.c.l.b16 %v689
    %v764 = vunpack.c.h.b16 %v689
    %v765 = vunpack.c.l.b16 %v690
    %v766 = vunpack.c.l.b16 %v691
    %v767 = vunpack.c.h.b16 %v691
    %v768 = vunpack.c.l.b16 %v692
    %v769 = vunpack.c.l.b16 %v693
    %v770 = vunpack.c.h.b16 %v693
    %v771 = vunpack.c.l.b16 %v694
    %v772 = vunpack.c.l.b16 %v695
    %v773 = vunpack.c.h.b16 %v695
    %v774 = vunpack.c.l.b16 %v696
    %v775 = vunpack.c.l.b16 %v697
    %v776 = vunpack.c.h.b16 %v697
    %v777 = vunpack.c.l.b16 %v698
    %v778 = vunpack.c.l.b16 %v699
    %v779 = vunpack.c.h.b16 %v699
    %v780 = vunpack.c.l.b16 %v700
    %v781 = vpack.c.b16 %v736, %v733
    %v782 = vpack.c.b16 %v737, %v734
    %v783 = vpack.c.b16 %v738, %v735
    %v784 = vpack.c.b16 %v742, %v739
    %v785 = vpack.c.b16 %v743, %v740
    %v786 = vpack.c.b16 %v744, %v741
    %v787 = vpack.c.b16 %v748, %v745
    %v788 = vpack.c.b16 %v749, %v746
    %v789 = vpack.c.b16 %v750, %v747
    %v790 = vpack.c.b16 %v754, %v751
    %v791 = vpack.c.b16 %v755, %v752
    %v792 = vpack.c.b16 %v756, %v753
    %v793 = vpack.c.b16 %v760, %v757
    %v794 = vpack.c.b16 %v761, %v758
    %v795 = vpack.c.b16 %v762, %v759
    %v796 = vpack.c.b16 %v766, %v763
    %v797 = vpack.c.b16 %v767, %v764
    %v798 = vpack.c.b16 %v768, %v765
    %v799 = vpack.c.b16 %v772, %v769
    %v800 = vpack.c.b16 %v773, %v770
    %v801 = vpack.c.b16 %v774, %v771
    %v802 = vpack.c.b16 %v778, %v775
    %v803 = vpack.c.b16 %v779, %v776
    %v804 = vpack.c.b16 %v780, %v777
    %829 = vmatpush.bf16.msra.mxu0 %v802
    %830 = vmatpush.bf16.msra.mxu0 %v799
    %831 = vmatpush.bf16.msra.mxu0 %v796
    %832 = vmatpush.bf16.msra.mxu0 %v793
    %833 = vmatpush.bf16.msra.mxu0 %v790
    %834 = vmatpush.bf16.msra.mxu0 %v787
    %835 = vmatpush.bf16.msra.mxu0 %v784
    %836 = vmatpush.bf16.msra.mxu0 %v781
    %837 = vmatmul.bf16.gmra.mxu0 %v668
    %v838 = vpop.f32.mrf.mxu0
    %v839 = vadd.f32 0.0, %v838
    %v840 = vpop.f32.mrf.mxu0
    %841 = vdwg.mxu0
    %842 = vmatpush.bf16.msra.mxu0 %v803
    %843 = vmatpush.bf16.msra.mxu0 %v800
    %844 = vmatpush.bf16.msra.mxu0 %v797
    %845 = vmatpush.bf16.msra.mxu0 %v794
    %846 = vmatpush.bf16.msra.mxu0 %v791
    %847 = vmatpush.bf16.msra.mxu0 %v788
    %848 = vmatpush.bf16.msra.mxu0 %v785
    %849 = vmatpush.bf16.msra.mxu0 %v782
    %850 = vmatmul.bf16.gmra.mxu0 %v668
    %v851 = vpop.f32.mrf.mxu0
    %v852 = vadd.f32 0.0, %v851
    %v853 = vpop.f32.mrf.mxu0
    %854 = vdwg.mxu0
    %855 = vmatpush.bf16.msra.mxu0 %v804
    %856 = vmatpush.bf16.msra.mxu0 %v801
    %857 = vmatpush.bf16.msra.mxu0 %v798
    %858 = vmatpush.bf16.msra.mxu0 %v795
    %859 = vmatpush.bf16.msra.mxu0 %v792
    %860 = vmatpush.bf16.msra.mxu0 %v789
    %861 = vmatpush.bf16.msra.mxu0 %v786
    %862 = vmatpush.bf16.msra.mxu0 %v783
    %863 = vmatmul.bf16.gmra.mxu0 %v668
    %v864 = vpop.f32.mrf.mxu0
    %v865 = vadd.f32 0.0, %v864
    %v866 = vpop.f32.mrf.mxu0
    %867 = vdwg.mxu0
    %v868 = vadd.f32 %v665, %v839
    %v869 = vxor.u32 %v868, 2147483648
    %v870 = vmul.f32 %v869, 1.442695
    %v871 = vpow.pop %v870
    %v872 = vadd.f32 %v871, 1.0
    %v873 = vrcp.pop %v872
    %v874 = vmul.f32 %v872, %v873
    %v875 = vsub.f32 1.0, %v874
    %v876 = vmul.f32 %v873, %v875
    %v877 = vadd.f32 %v873, %v876
    %vm878 = vweird.f32 %v872
    %vm879 = vweird.f32 %v873
    %vm880 = vmor %vm878, %vm879
    %v881 = vsel %vm880, %v873, %v877
    %v882 = vand.u32 2147483647, %v872
    %vm883 = vcmp.eq.f32.partialorder %v882, 8.507059e+37
    %v884 = vand.u32 %v872, 2147483648
    %v885 = vor.u32 1.1754944e-38, %v884
    %v886 = vsel %vm883, %v885, %v881
    %v887 = vmul.f32 1.0, %v886
    %v888 = vadd.f32 %v666, %v852
    %v889 = vxor.u32 %v888, 2147483648
    %v890 = vmul.f32 %v889, 1.442695
    %v891 = vpow.pop %v890
    %v892 = vadd.f32 %v891, 1.0
    %v893 = vrcp.pop %v892
    %v894 = vmul.f32 %v892, %v893
    %v895 = vsub.f32 1.0, %v894
    %v896 = vmul.f32 %v893, %v895
    %v897 = vadd.f32 %v893, %v896
    %vm898 = vweird.f32 %v892
    %vm899 = vweird.f32 %v893
    %vm900 = vmor %vm898, %vm899
    %v901 = vsel %vm900, %v893, %v897
    %v902 = vand.u32 2147483647, %v892
    %vm903 = vcmp.eq.f32.partialorder %v902, 8.507059e+37
    %v904 = vand.u32 %v892, 2147483648
    %v905 = vor.u32 1.1754944e-38, %v904
    %v906 = vsel %vm903, %v905, %v901
    %v907 = vmul.f32 1.0, %v906
    %v908 = vadd.f32 %v865, %v405
    %v909 = vmul.f32 %v887, %v908
    %v910 = vadd.f32 %v667, %v909
    %v911 = vtanh.pop %v910
    %v912 = vsub.f32 %v660, %v911
    %v913 = vmul.f32 %v907, %v912
    %v914 = vadd.f32 %v911, %v913
    %915 = vst [vmem:[%s664] sm:$0xff] %v914
    %s916 = smul.u32 2, 3
    %s917 = smul.addr %s916, 8
    %s918 = scalar_lea.vmem [#allocation7], %s917
    %v919 = vld [vmem:[%s918] sm:$0xff]
    %v920 = vld [vmem:[%s918 + $0x8] sm:$0xff]
    %v921 = vld [vmem:[%s918 + $0x10] sm:$0xff]
    %v922 = vpack.c.bf16 %v914, %v914
    %v923 = vld [vmem:[#allocation3] sm:$0xff]
    %v924 = vld [vmem:[#allocation3 + $0x8] sm:$0xf]
    %v925 = vld [vmem:[#allocation3 + $0xc] sm:$0xff]
    %v926 = vld [vmem:[#allocation3 + $0x14] sm:$0xf]
    %v927 = vld [vmem:[#allocation3 + $0x18] sm:$0xff]
    %v928 = vld [vmem:[#allocation3 + $0x20] sm:$0xf]
    %v929 = vld [vmem:[#allocation3 + $0x24] sm:$0xff]
    %v930 = vld [vmem:[#allocation3 + $0x2c] sm:$0xf]
    %v931 = vld [vmem:[#allocation3 + $0x30] sm:$0xff]
    %v932 = vld [vmem:[#allocation3 + $0x38] sm:$0xf]
    %v933 = vld [vmem:[#allocation3 + $0x3c] sm:$0xff]
    %v934 = vld [vmem:[#allocation3 + $0x44] sm:$0xf]
    %v935 = vld [vmem:[#allocation3 + $0x48] sm:$0xff]
    %v936 = vld [vmem:[#allocation3 + $0x50] sm:$0xf]
    %v937 = vld [vmem:[#allocation3 + $0x54] sm:$0xff]
    %v938 = vld [vmem:[#allocation3 + $0x5c] sm:$0xf]
    %v939 = vld [vmem:[#allocation3 + $0x60] sm:$0xff]
    %v940 = vld [vmem:[#allocation3 + $0x68] sm:$0xf]
    %v941 = vld [vmem:[#allocation3 + $0x6c] sm:$0xff]
    %v942 = vld [vmem:[#allocation3 + $0x74] sm:$0xf]
    %v943 = vld [vmem:[#allocation3 + $0x78] sm:$0xff]
    %v944 = vld [vmem:[#allocation3 + $0x80] sm:$0xf]
    %v945 = vld [vmem:[#allocation3 + $0x84] sm:$0xff]
    %v946 = vld [vmem:[#allocation3 + $0x8c] sm:$0xf]
    %v947 = vld [vmem:[#allocation3 + $0x90] sm:$0xff]
    %v948 = vld [vmem:[#allocation3 + $0x98] sm:$0xf]
    %v949 = vld [vmem:[#allocation3 + $0x9c] sm:$0xff]
    %v950 = vld [vmem:[#allocation3 + $0xa4] sm:$0xf]
    %v951 = vld [vmem:[#allocation3 + $0xa8] sm:$0xff]
    %v952 = vld [vmem:[#allocation3 + $0xb0] sm:$0xf]
    %v953 = vld [vmem:[#allocation3 + $0xb4] sm:$0xff]
    %v954 = vld [vmem:[#allocation3 + $0xbc] sm:$0xf]
    %v987 = vunpack.c.l.b16 %v923
    %v988 = vunpack.c.h.b16 %v923
    %v989 = vunpack.c.l.b16 %v924
    %v990 = vunpack.c.l.b16 %v925
    %v991 = vunpack.c.h.b16 %v925
    %v992 = vunpack.c.l.b16 %v926
    %v993 = vunpack.c.l.b16 %v927
    %v994 = vunpack.c.h.b16 %v927
    %v995 = vunpack.c.l.b16 %v928
    %v996 = vunpack.c.l.b16 %v929
    %v997 = vunpack.c.h.b16 %v929
    %v998 = vunpack.c.l.b16 %v930
    %v999 = vunpack.c.l.b16 %v931
    %v1000 = vunpack.c.h.b16 %v931
    %v1001 = vunpack.c.l.b16 %v932
    %v1002 = vunpack.c.l.b16 %v933
    %v1003 = vunpack.c.h.b16 %v933
    %v1004 = vunpack.c.l.b16 %v934
    %v1005 = vunpack.c.l.b16 %v935
    %v1006 = vunpack.c.h.b16 %v935
    %v1007 = vunpack.c.l.b16 %v936
    %v1008 = vunpack.c.l.b16 %v937
    %v1009 = vunpack.c.h.b16 %v937
    %v1010 = vunpack.c.l.b16 %v938
    %v1011 = vunpack.c.l.b16 %v939
    %v1012 = vunpack.c.h.b16 %v939
    %v1013 = vunpack.c.l.b16 %v940
    %v1014 = vunpack.c.l.b16 %v941
    %v1015 = vunpack.c.h.b16 %v941
    %v1016 = vunpack.c.l.b16 %v942
    %v1017 = vunpack.c.l.b16 %v943
    %v1018 = vunpack.c.h.b16 %v943
    %v1019 = vunpack.c.l.b16 %v944
    %v1020 = vunpack.c.l.b16 %v945
    %v1021 = vunpack.c.h.b16 %v945
    %v1022 = vunpack.c.l.b16 %v946
    %v1023 = vunpack.c.l.b16 %v947
    %v1024 = vunpack.c.h.b16 %v947
    %v1025 = vunpack.c.l.b16 %v948
    %v1026 = vunpack.c.l.b16 %v949
    %v1027 = vunpack.c.h.b16 %v949
    %v1028 = vunpack.c.l.b16 %v950
    %v1029 = vunpack.c.l.b16 %v951
    %v1030 = vunpack.c.h.b16 %v951
    %v1031 = vunpack.c.l.b16 %v952
    %v1032 = vunpack.c.l.b16 %v953
    %v1033 = vunpack.c.h.b16 %v953
    %v1034 = vunpack.c.l.b16 %v954
    %v1035 = vpack.c.b16 %v990, %v987
    %v1036 = vpack.c.b16 %v991, %v988
    %v1037 = vpack.c.b16 %v992, %v989
    %v1038 = vpack.c.b16 %v996, %v993
    %v1039 = vpack.c.b16 %v997, %v994
    %v1040 = vpack.c.b16 %v998, %v995
    %v1041 = vpack.c.b16 %v1002, %v999
    %v1042 = vpack.c.b16 %v1003, %v1000
    %v1043 = vpack.c.b16 %v1004, %v1001
    %v1044 = vpack.c.b16 %v1008, %v1005
    %v1045 = vpack.c.b16 %v1009, %v1006
    %v1046 = vpack.c.b16 %v1010, %v1007
    %v1047 = vpack.c.b16 %v1014, %v1011
    %v1048 = vpack.c.b16 %v1015, %v1012
    %v1049 = vpack.c.b16 %v1016, %v1013
    %v1050 = vpack.c.b16 %v1020, %v1017
    %v1051 = vpack.c.b16 %v1021, %v1018
    %v1052 = vpack.c.b16 %v1022, %v1019
    %v1053 = vpack.c.b16 %v1026, %v1023
    %v1054 = vpack.c.b16 %v1027, %v1024
    %v1055 = vpack.c.b16 %v1028, %v1025
    %v1056 = vpack.c.b16 %v1032, %v1029
    %v1057 = vpack.c.b16 %v1033, %v1030
    %v1058 = vpack.c.b16 %v1034, %v1031
    %1083 = vmatpush.bf16.msra.mxu0 %v1056
    %1084 = vmatpush.bf16.msra.mxu0 %v1053
    %1085 = vmatpush.bf16.msra.mxu0 %v1050
    %1086 = vmatpush.bf16.msra.mxu0 %v1047
    %1087 = vmatpush.bf16.msra.mxu0 %v1044
    %1088 = vmatpush.bf16.msra.mxu0 %v1041
    %1089 = vmatpush.bf16.msra.mxu0 %v1038
    %1090 = vmatpush.bf16.msra.mxu0 %v1035
    %1091 = vmatmul.bf16.gmra.mxu0 %v922
    %v1092 = vpop.f32.mrf.mxu0
    %v1093 = vadd.f32 0.0, %v1092
    %v1094 = vpop.f32.mrf.mxu0
    %1095 = vdwg.mxu0
    %1096 = vmatpush.bf16.msra.mxu0 %v1057
    %1097 = vmatpush.bf16.msra.mxu0 %v1054
    %1098 = vmatpush.bf16.msra.mxu0 %v1051
    %1099 = vmatpush.bf16.msra.mxu0 %v1048
    %1100 = vmatpush.bf16.msra.mxu0 %v1045
    %1101 = vmatpush.bf16.msra.mxu0 %v1042
    %1102 = vmatpush.bf16.msra.mxu0 %v1039
    %1103 = vmatpush.bf16.msra.mxu0 %v1036
    %1104 = vmatmul.bf16.gmra.mxu0 %v922
    %v1105 = vpop.f32.mrf.mxu0
    %v1106 = vadd.f32 0.0, %v1105
    %v1107 = vpop.f32.mrf.mxu0
    %1108 = vdwg.mxu0
    %1109 = vmatpush.bf16.msra.mxu0 %v1058
    %1110 = vmatpush.bf16.msra.mxu0 %v1055
    %1111 = vmatpush.bf16.msra.mxu0 %v1052
    %1112 = vmatpush.bf16.msra.mxu0 %v1049
    %1113 = vmatpush.bf16.msra.mxu0 %v1046
    %1114 = vmatpush.bf16.msra.mxu0 %v1043
    %1115 = vmatpush.bf16.msra.mxu0 %v1040
    %1116 = vmatpush.bf16.msra.mxu0 %v1037
    %1117 = vmatmul.bf16.gmra.mxu0 %v922
    %v1118 = vpop.f32.mrf.mxu0
    %v1119 = vadd.f32 0.0, %v1118
    %v1120 = vpop.f32.mrf.mxu0
    %1121 = vdwg.mxu0
    %v1122 = vadd.f32 %v919, %v1093
    %v1123 = vxor.u32 %v1122, 2147483648
    %v1124 = vmul.f32 %v1123, 1.442695
    %v1125 = vpow.pop %v1124
    %v1126 = vadd.f32 %v1125, 1.0
    %v1127 = vrcp.pop %v1126
    %v1128 = vmul.f32 %v1126, %v1127
    %v1129 = vsub.f32 1.0, %v1128
    %v1130 = vmul.f32 %v1127, %v1129
    %v1131 = vadd.f32 %v1127, %v1130
    %vm1132 = vweird.f32 %v1126
    %vm1133 = vweird.f32 %v1127
    %vm1134 = vmor %vm1132, %vm1133
    %v1135 = vsel %vm1134, %v1127, %v1131
    %v1136 = vand.u32 2147483647, %v1126
    %vm1137 = vcmp.eq.f32.partialorder %v1136, 8.507059e+37
    %v1138 = vand.u32 %v1126, 2147483648
    %v1139 = vor.u32 1.1754944e-38, %v1138
    %v1140 = vsel %vm1137, %v1139, %v1135
    %v1141 = vmul.f32 1.0, %v1140
    %v1142 = vadd.f32 %v920, %v1106
    %v1143 = vxor.u32 %v1142, 2147483648
    %v1144 = vmul.f32 %v1143, 1.442695
    %v1145 = vpow.pop %v1144
    %v1146 = vadd.f32 %v1145, 1.0
    %v1147 = vrcp.pop %v1146
    %v1148 = vmul.f32 %v1146, %v1147
    %v1149 = vsub.f32 1.0, %v1148
    %v1150 = vmul.f32 %v1147, %v1149
    %v1151 = vadd.f32 %v1147, %v1150
    %vm1152 = vweird.f32 %v1146
    %vm1153 = vweird.f32 %v1147
    %vm1154 = vmor %vm1152, %vm1153
    %v1155 = vsel %vm1154, %v1147, %v1151
    %v1156 = vand.u32 2147483647, %v1146
    %vm1157 = vcmp.eq.f32.partialorder %v1156, 8.507059e+37
    %v1158 = vand.u32 %v1146, 2147483648
    %v1159 = vor.u32 1.1754944e-38, %v1158
    %v1160 = vsel %vm1157, %v1159, %v1155
    %v1161 = vmul.f32 1.0, %v1160
    %v1162 = vadd.f32 %v1119, %v405
    %v1163 = vmul.f32 %v1141, %v1162
    %v1164 = vadd.f32 %v921, %v1163
    %v1165 = vtanh.pop %v1164
    %v1166 = vsub.f32 %v914, %v1165
    %v1167 = vmul.f32 %v1161, %v1166
    %v1168 = vadd.f32 %v1165, %v1167
    %1169 = vst [vmem:[%s918] sm:$0xff] %v1168
    %s1170 = smul.u32 3, 3
    %s1171 = smul.addr %s1170, 8
    %s1172 = scalar_lea.vmem [#allocation7], %s1171
    %v1173 = vld [vmem:[%s1172] sm:$0xff]
    %v1174 = vld [vmem:[%s1172 + $0x8] sm:$0xff]
    %v1175 = vld [vmem:[%s1172 + $0x10] sm:$0xff]
    %v1176 = vpack.c.bf16 %v1168, %v1168
    %v1177 = vld [vmem:[#allocation3] sm:$0xff]
    %v1178 = vld [vmem:[#allocation3 + $0x8] sm:$0xf]
    %v1179 = vld [vmem:[#allocation3 + $0xc] sm:$0xff]
    %v1180 = vld [vmem:[#allocation3 + $0x14] sm:$0xf]
    %v1181 = vld [vmem:[#allocation3 + $0x18] sm:$0xff]
    %v1182 = vld [vmem:[#allocation3 + $0x20] sm:$0xf]
    %v1183 = vld [vmem:[#allocation3 + $0x24] sm:$0xff]
    %v1184 = vld [vmem:[#allocation3 + $0x2c] sm:$0xf]
    %v1185 = vld [vmem:[#allocation3 + $0x30] sm:$0xff]
    %v1186 = vld [vmem:[#allocation3 + $0x38] sm:$0xf]
    %v1187 = vld [vmem:[#allocation3 + $0x3c] sm:$0xff]
    %v1188 = vld [vmem:[#allocation3 + $0x44] sm:$0xf]
    %v1189 = vld [vmem:[#allocation3 + $0x48] sm:$0xff]
    %v1190 = vld [vmem:[#allocation3 + $0x50] sm:$0xf]
    %v1191 = vld [vmem:[#allocation3 + $0x54] sm:$0xff]
    %v1192 = vld [vmem:[#allocation3 + $0x5c] sm:$0xf]
    %v1193 = vld [vmem:[#allocation3 + $0x60] sm:$0xff]
    %v1194 = vld [vmem:[#allocation3 + $0x68] sm:$0xf]
    %v1195 = vld [vmem:[#allocation3 + $0x6c] sm:$0xff]
    %v1196 = vld [vmem:[#allocation3 + $0x74] sm:$0xf]
    %v1197 = vld [vmem:[#allocation3 + $0x78] sm:$0xff]
    %v1198 = vld [vmem:[#allocation3 + $0x80] sm:$0xf]
    %v1199 = vld [vmem:[#allocation3 + $0x84] sm:$0xff]
    %v1200 = vld [vmem:[#allocation3 + $0x8c] sm:$0xf]
    %v1201 = vld [vmem:[#allocation3 + $0x90] sm:$0xff]
    %v1202 = vld [vmem:[#allocation3 + $0x98] sm:$0xf]
    %v1203 = vld [vmem:[#allocation3 + $0x9c] sm:$0xff]
    %v1204 = vld [vmem:[#allocation3 + $0xa4] sm:$0xf]
    %v1205 = vld [vmem:[#allocation3 + $0xa8] sm:$0xff]
    %v1206 = vld [vmem:[#allocation3 + $0xb0] sm:$0xf]
    %v1207 = vld [vmem:[#allocation3 + $0xb4] sm:$0xff]
    %v1208 = vld [vmem:[#allocation3 + $0xbc] sm:$0xf]
    %v1241 = vunpack.c.l.b16 %v1177
    %v1242 = vunpack.c.h.b16 %v1177
    %v1243 = vunpack.c.l.b16 %v1178
    %v1244 = vunpack.c.l.b16 %v1179
    %v1245 = vunpack.c.h.b16 %v1179
    %v1246 = vunpack.c.l.b16 %v1180
    %v1247 = vunpack.c.l.b16 %v1181
    %v1248 = vunpack.c.h.b16 %v1181
    %v1249 = vunpack.c.l.b16 %v1182
    %v1250 = vunpack.c.l.b16 %v1183
    %v1251 = vunpack.c.h.b16 %v1183
    %v1252 = vunpack.c.l.b16 %v1184
    %v1253 = vunpack.c.l.b16 %v1185
    %v1254 = vunpack.c.h.b16 %v1185
    %v1255 = vunpack.c.l.b16 %v1186
    %v1256 = vunpack.c.l.b16 %v1187
    %v1257 = vunpack.c.h.b16 %v1187
    %v1258 = vunpack.c.l.b16 %v1188
    %v1259 = vunpack.c.l.b16 %v1189
    %v1260 = vunpack.c.h.b16 %v1189
    %v1261 = vunpack.c.l.b16 %v1190
    %v1262 = vunpack.c.l.b16 %v1191
    %v1263 = vunpack.c.h.b16 %v1191
    %v1264 = vunpack.c.l.b16 %v1192
    %v1265 = vunpack.c.l.b16 %v1193
    %v1266 = vunpack.c.h.b16 %v1193
    %v1267 = vunpack.c.l.b16 %v1194
    %v1268 = vunpack.c.l.b16 %v1195
    %v1269 = vunpack.c.h.b16 %v1195
    %v1270 = vunpack.c.l.b16 %v1196
    %v1271 = vunpack.c.l.b16 %v1197
    %v1272 = vunpack.c.h.b16 %v1197
    %v1273 = vunpack.c.l.b16 %v1198
    %v1274 = vunpack.c.l.b16 %v1199
    %v1275 = vunpack.c.h.b16 %v1199
    %v1276 = vunpack.c.l.b16 %v1200
    %v1277 = vunpack.c.l.b16 %v1201
    %v1278 = vunpack.c.h.b16 %v1201
    %v1279 = vunpack.c.l.b16 %v1202
    %v1280 = vunpack.c.l.b16 %v1203
    %v1281 = vunpack.c.h.b16 %v1203
    %v1282 = vunpack.c.l.b16 %v1204
    %v1283 = vunpack.c.l.b16 %v1205
    %v1284 = vunpack.c.h.b16 %v1205
    %v1285 = vunpack.c.l.b16 %v1206
    %v1286 = vunpack.c.l.b16 %v1207
    %v1287 = vunpack.c.h.b16 %v1207
    %v1288 = vunpack.c.l.b16 %v1208
    %v1289 = vpack.c.b16 %v1244, %v1241
    %v1290 = vpack.c.b16 %v1245, %v1242
    %v1291 = vpack.c.b16 %v1246, %v1243
    %v1292 = vpack.c.b16 %v1250, %v1247
    %v1293 = vpack.c.b16 %v1251, %v1248
    %v1294 = vpack.c.b16 %v1252, %v1249
    %v1295 = vpack.c.b16 %v1256, %v1253
    %v1296 = vpack.c.b16 %v1257, %v1254
    %v1297 = vpack.c.b16 %v1258, %v1255
    %v1298 = vpack.c.b16 %v1262, %v1259
    %v1299 = vpack.c.b16 %v1263, %v1260
    %v1300 = vpack.c.b16 %v1264, %v1261
    %v1301 = vpack.c.b16 %v1268, %v1265
    %v1302 = vpack.c.b16 %v1269, %v1266
    %v1303 = vpack.c.b16 %v1270, %v1267
    %v1304 = vpack.c.b16 %v1274, %v1271
    %v1305 = vpack.c.b16 %v1275, %v1272
    %v1306 = vpack.c.b16 %v1276, %v1273
    %v1307 = vpack.c.b16 %v1280, %v1277
    %v1308 = vpack.c.b16 %v1281, %v1278
    %v1309 = vpack.c.b16 %v1282, %v1279
    %v1310 = vpack.c.b16 %v1286, %v1283
    %v1311 = vpack.c.b16 %v1287, %v1284
    %v1312 = vpack.c.b16 %v1288, %v1285
    %1337 = vmatpush.bf16.msra.mxu0 %v1310
    %1338 = vmatpush.bf16.msra.mxu0 %v1307
    %1339 = vmatpush.bf16.msra.mxu0 %v1304
    %1340 = vmatpush.bf16.msra.mxu0 %v1301
    %1341 = vmatpush.bf16.msra.mxu0 %v1298
    %1342 = vmatpush.bf16.msra.mxu0 %v1295
    %1343 = vmatpush.bf16.msra.mxu0 %v1292
    %1344 = vmatpush.bf16.msra.mxu0 %v1289
    %1345 = vmatmul.bf16.gmra.mxu0 %v1176
    %v1346 = vpop.f32.mrf.mxu0
    %v1347 = vadd.f32 0.0, %v1346
    %v1348 = vpop.f32.mrf.mxu0
    %1349 = vdwg.mxu0
    %1350 = vmatpush.bf16.msra.mxu0 %v1311
    %1351 = vmatpush.bf16.msra.mxu0 %v1308
    %1352 = vmatpush.bf16.msra.mxu0 %v1305
    %1353 = vmatpush.bf16.msra.mxu0 %v1302
    %1354 = vmatpush.bf16.msra.mxu0 %v1299
    %1355 = vmatpush.bf16.msra.mxu0 %v1296
    %1356 = vmatpush.bf16.msra.mxu0 %v1293
    %1357 = vmatpush.bf16.msra.mxu0 %v1290
    %1358 = vmatmul.bf16.gmra.mxu0 %v1176
    %v1359 = vpop.f32.mrf.mxu0
    %v1360 = vadd.f32 0.0, %v1359
    %v1361 = vpop.f32.mrf.mxu0
    %1362 = vdwg.mxu0
    %1363 = vmatpush.bf16.msra.mxu0 %v1312
    %1364 = vmatpush.bf16.msra.mxu0 %v1309
    %1365 = vmatpush.bf16.msra.mxu0 %v1306
    %1366 = vmatpush.bf16.msra.mxu0 %v1303
    %1367 = vmatpush.bf16.msra.mxu0 %v1300
    %1368 = vmatpush.bf16.msra.mxu0 %v1297
    %1369 = vmatpush.bf16.msra.mxu0 %v1294
    %1370 = vmatpush.bf16.msra.mxu0 %v1291
    %1371 = vmatmul.bf16.gmra.mxu0 %v1176
    %v1372 = vpop.f32.mrf.mxu0
    %v1373 = vadd.f32 0.0, %v1372
    %v1374 = vpop.f32.mrf.mxu0
    %1375 = vdwg.mxu0
    %v1376 = vadd.f32 %v1173, %v1347
    %v1377 = vxor.u32 %v1376, 2147483648
    %v1378 = vmul.f32 %v1377, 1.442695
    %v1379 = vpow.pop %v1378
    %v1380 = vadd.f32 %v1379, 1.0
    %v1381 = vrcp.pop %v1380
    %v1382 = vmul.f32 %v1380, %v1381
    %v1383 = vsub.f32 1.0, %v1382
    %v1384 = vmul.f32 %v1381, %v1383
    %v1385 = vadd.f32 %v1381, %v1384
    %vm1386 = vweird.f32 %v1380
    %vm1387 = vweird.f32 %v1381
    %vm1388 = vmor %vm1386, %vm1387
    %v1389 = vsel %vm1388, %v1381, %v1385
    %v1390 = vand.u32 2147483647, %v1380
    %vm1391 = vcmp.eq.f32.partialorder %v1390, 8.507059e+37
    %v1392 = vand.u32 %v1380, 2147483648
    %v1393 = vor.u32 1.1754944e-38, %v1392
    %v1394 = vsel %vm1391, %v1393, %v1389
    %v1395 = vmul.f32 1.0, %v1394
    %v1396 = vadd.f32 %v1174, %v1360
    %v1397 = vxor.u32 %v1396, 2147483648
    %v1398 = vmul.f32 %v1397, 1.442695
    %v1399 = vpow.pop %v1398
    %v1400 = vadd.f32 %v1399, 1.0
    %v1401 = vrcp.pop %v1400
    %v1402 = vmul.f32 %v1400, %v1401
    %v1403 = vsub.f32 1.0, %v1402
    %v1404 = vmul.f32 %v1401, %v1403
    %v1405 = vadd.f32 %v1401, %v1404
    %vm1406 = vweird.f32 %v1400
    %vm1407 = vweird.f32 %v1401
    %vm1408 = vmor %vm1406, %vm1407
    %v1409 = vsel %vm1408, %v1401, %v1405
    %v1410 = vand.u32 2147483647, %v1400
    %vm1411 = vcmp.eq.f32.partialorder %v1410, 8.507059e+37
    %v1412 = vand.u32 %v1400, 2147483648
    %v1413 = vor.u32 1.1754944e-38, %v1412
    %v1414 = vsel %vm1411, %v1413, %v1409
    %v1415 = vmul.f32 1.0, %v1414
    %v1416 = vadd.f32 %v1373, %v405
    %v1417 = vmul.f32 %v1395, %v1416
    %v1418 = vadd.f32 %v1175, %v1417
    %v1419 = vtanh.pop %v1418
    %v1420 = vsub.f32 %v1168, %v1419
    %v1421 = vmul.f32 %v1415, %v1420
    %v1422 = vadd.f32 %v1419, %v1421
    %1423 = vst [vmem:[%s1172] sm:$0xff] %v1422
    %s1424 = smul.u32 4, 3
    %s1425 = smul.addr %s1424, 8
    %s1426 = scalar_lea.vmem [#allocation7], %s1425
    %v1427 = vld [vmem:[%s1426] sm:$0xff]
    %v1428 = vld [vmem:[%s1426 + $0x8] sm:$0xff]
    %v1429 = vld [vmem:[%s1426 + $0x10] sm:$0xff]
    %v1430 = vpack.c.bf16 %v1422, %v1422
    %v1431 = vld [vmem:[#allocation3] sm:$0xff]
    %v1432 = vld [vmem:[#allocation3 + $0x8] sm:$0xf]
    %v1433 = vld [vmem:[#allocation3 + $0xc] sm:$0xff]
    %v1434 = vld [vmem:[#allocation3 + $0x14] sm:$0xf]
    %v1435 = vld [vmem:[#allocation3 + $0x18] sm:$0xff]
    %v1436 = vld [vmem:[#allocation3 + $0x20] sm:$0xf]
    %v1437 = vld [vmem:[#allocation3 + $0x24] sm:$0xff]
    %v1438 = vld [vmem:[#allocation3 + $0x2c] sm:$0xf]
    %v1439 = vld [vmem:[#allocation3 + $0x30] sm:$0xff]
    %v1440 = vld [vmem:[#allocation3 + $0x38] sm:$0xf]
    %v1441 = vld [vmem:[#allocation3 + $0x3c] sm:$0xff]
    %v1442 = vld [vmem:[#allocation3 + $0x44] sm:$0xf]
    %v1443 = vld [vmem:[#allocation3 + $0x48] sm:$0xff]
    %v1444 = vld [vmem:[#allocation3 + $0x50] sm:$0xf]
    %v1445 = vld [vmem:[#allocation3 + $0x54] sm:$0xff]
    %v1446 = vld [vmem:[#allocation3 + $0x5c] sm:$0xf]
    %v1447 = vld [vmem:[#allocation3 + $0x60] sm:$0xff]
    %v1448 = vld [vmem:[#allocation3 + $0x68] sm:$0xf]
    %v1449 = vld [vmem:[#allocation3 + $0x6c] sm:$0xff]
    %v1450 = vld [vmem:[#allocation3 + $0x74] sm:$0xf]
    %v1451 = vld [vmem:[#allocation3 + $0x78] sm:$0xff]
    %v1452 = vld [vmem:[#allocation3 + $0x80] sm:$0xf]
    %v1453 = vld [vmem:[#allocation3 + $0x84] sm:$0xff]
    %v1454 = vld [vmem:[#allocation3 + $0x8c] sm:$0xf]
    %v1455 = vld [vmem:[#allocation3 + $0x90] sm:$0xff]
    %v1456 = vld [vmem:[#allocation3 + $0x98] sm:$0xf]
    %v1457 = vld [vmem:[#allocation3 + $0x9c] sm:$0xff]
    %v1458 = vld [vmem:[#allocation3 + $0xa4] sm:$0xf]
    %v1459 = vld [vmem:[#allocation3 + $0xa8] sm:$0xff]
    %v1460 = vld [vmem:[#allocation3 + $0xb0] sm:$0xf]
    %v1461 = vld [vmem:[#allocation3 + $0xb4] sm:$0xff]
    %v1462 = vld [vmem:[#allocation3 + $0xbc] sm:$0xf]
    %v1495 = vunpack.c.l.b16 %v1431
    %v1496 = vunpack.c.h.b16 %v1431
    %v1497 = vunpack.c.l.b16 %v1432
    %v1498 = vunpack.c.l.b16 %v1433
    %v1499 = vunpack.c.h.b16 %v1433
    %v1500 = vunpack.c.l.b16 %v1434
    %v1501 = vunpack.c.l.b16 %v1435
    %v1502 = vunpack.c.h.b16 %v1435
    %v1503 = vunpack.c.l.b16 %v1436
    %v1504 = vunpack.c.l.b16 %v1437
    %v1505 = vunpack.c.h.b16 %v1437
    %v1506 = vunpack.c.l.b16 %v1438
    %v1507 = vunpack.c.l.b16 %v1439
    %v1508 = vunpack.c.h.b16 %v1439
    %v1509 = vunpack.c.l.b16 %v1440
    %v1510 = vunpack.c.l.b16 %v1441
    %v1511 = vunpack.c.h.b16 %v1441
    %v1512 = vunpack.c.l.b16 %v1442
    %v1513 = vunpack.c.l.b16 %v1443
    %v1514 = vunpack.c.h.b16 %v1443
    %v1515 = vunpack.c.l.b16 %v1444
    %v1516 = vunpack.c.l.b16 %v1445
    %v1517 = vunpack.c.h.b16 %v1445
    %v1518 = vunpack.c.l.b16 %v1446
    %v1519 = vunpack.c.l.b16 %v1447
    %v1520 = vunpack.c.h.b16 %v1447
    %v1521 = vunpack.c.l.b16 %v1448
    %v1522 = vunpack.c.l.b16 %v1449
    %v1523 = vunpack.c.h.b16 %v1449
    %v1524 = vunpack.c.l.b16 %v1450
    %v1525 = vunpack.c.l.b16 %v1451
    %v1526 = vunpack.c.h.b16 %v1451
    %v1527 = vunpack.c.l.b16 %v1452
    %v1528 = vunpack.c.l.b16 %v1453
    %v1529 = vunpack.c.h.b16 %v1453
    %v1530 = vunpack.c.l.b16 %v1454
    %v1531 = vunpack.c.l.b16 %v1455
    %v1532 = vunpack.c.h.b16 %v1455
    %v1533 = vunpack.c.l.b16 %v1456
    %v1534 = vunpack.c.l.b16 %v1457
    %v1535 = vunpack.c.h.b16 %v1457
    %v1536 = vunpack.c.l.b16 %v1458
    %v1537 = vunpack.c.l.b16 %v1459
    %v1538 = vunpack.c.h.b16 %v1459
    %v1539 = vunpack.c.l.b16 %v1460
    %v1540 = vunpack.c.l.b16 %v1461
    %v1541 = vunpack.c.h.b16 %v1461
    %v1542 = vunpack.c.l.b16 %v1462
    %v1543 = vpack.c.b16 %v1498, %v1495
    %v1544 = vpack.c.b16 %v1499, %v1496
    %v1545 = vpack.c.b16 %v1500, %v1497
    %v1546 = vpack.c.b16 %v1504, %v1501
    %v1547 = vpack.c.b16 %v1505, %v1502
    %v1548 = vpack.c.b16 %v1506, %v1503
    %v1549 = vpack.c.b16 %v1510, %v1507
    %v1550 = vpack.c.b16 %v1511, %v1508
    %v1551 = vpack.c.b16 %v1512, %v1509
    %v1552 = vpack.c.b16 %v1516, %v1513
    %v1553 = vpack.c.b16 %v1517, %v1514
    %v1554 = vpack.c.b16 %v1518, %v1515
    %v1555 = vpack.c.b16 %v1522, %v1519
    %v1556 = vpack.c.b16 %v1523, %v1520
    %v1557 = vpack.c.b16 %v1524, %v1521
    %v1558 = vpack.c.b16 %v1528, %v1525
    %v1559 = vpack.c.b16 %v1529, %v1526
    %v1560 = vpack.c.b16 %v1530, %v1527
    %v1561 = vpack.c.b16 %v1534, %v1531
    %v1562 = vpack.c.b16 %v1535, %v1532
    %v1563 = vpack.c.b16 %v1536, %v1533
    %v1564 = vpack.c.b16 %v1540, %v1537
    %v1565 = vpack.c.b16 %v1541, %v1538
    %v1566 = vpack.c.b16 %v1542, %v1539
    %1591 = vmatpush.bf16.msra.mxu0 %v1564
    %1592 = vmatpush.bf16.msra.mxu0 %v1561
    %1593 = vmatpush.bf16.msra.mxu0 %v1558
    %1594 = vmatpush.bf16.msra.mxu0 %v1555
    %1595 = vmatpush.bf16.msra.mxu0 %v1552
    %1596 = vmatpush.bf16.msra.mxu0 %v1549
    %1597 = vmatpush.bf16.msra.mxu0 %v1546
    %1598 = vmatpush.bf16.msra.mxu0 %v1543
    %1599 = vmatmul.bf16.gmra.mxu0 %v1430
    %v1600 = vpop.f32.mrf.mxu0
    %v1601 = vadd.f32 0.0, %v1600
    %v1602 = vpop.f32.mrf.mxu0
    %1603 = vdwg.mxu0
    %1604 = vmatpush.bf16.msra.mxu0 %v1565
    %1605 = vmatpush.bf16.msra.mxu0 %v1562
    %1606 = vmatpush.bf16.msra.mxu0 %v1559
    %1607 = vmatpush.bf16.msra.mxu0 %v1556
    %1608 = vmatpush.bf16.msra.mxu0 %v1553
    %1609 = vmatpush.bf16.msra.mxu0 %v1550
    %1610 = vmatpush.bf16.msra.mxu0 %v1547
    %1611 = vmatpush.bf16.msra.mxu0 %v1544
    %1612 = vmatmul.bf16.gmra.mxu0 %v1430
    %v1613 = vpop.f32.mrf.mxu0
    %v1614 = vadd.f32 0.0, %v1613
    %v1615 = vpop.f32.mrf.mxu0
    %1616 = vdwg.mxu0
    %1617 = vmatpush.bf16.msra.mxu0 %v1566
    %1618 = vmatpush.bf16.msra.mxu0 %v1563
    %1619 = vmatpush.bf16.msra.mxu0 %v1560
    %1620 = vmatpush.bf16.msra.mxu0 %v1557
    %1621 = vmatpush.bf16.msra.mxu0 %v1554
    %1622 = vmatpush.bf16.msra.mxu0 %v1551
    %1623 = vmatpush.bf16.msra.mxu0 %v1548
    %1624 = vmatpush.bf16.msra.mxu0 %v1545
    %1625 = vmatmul.bf16.gmra.mxu0 %v1430
    %v1626 = vpop.f32.mrf.mxu0
    %v1627 = vadd.f32 0.0, %v1626
    %v1628 = vpop.f32.mrf.mxu0
    %1629 = vdwg.mxu0
    %v1630 = vadd.f32 %v1427, %v1601
    %v1631 = vxor.u32 %v1630, 2147483648
    %v1632 = vmul.f32 %v1631, 1.442695
    %v1633 = vpow.pop %v1632
    %v1634 = vadd.f32 %v1633, 1.0
    %v1635 = vrcp.pop %v1634
    %v1636 = vmul.f32 %v1634, %v1635
    %v1637 = vsub.f32 1.0, %v1636
    %v1638 = vmul.f32 %v1635, %v1637
    %v1639 = vadd.f32 %v1635, %v1638
    %vm1640 = vweird.f32 %v1634
    %vm1641 = vweird.f32 %v1635
    %vm1642 = vmor %vm1640, %vm1641
    %v1643 = vsel %vm1642, %v1635, %v1639
    %v1644 = vand.u32 2147483647, %v1634
    %vm1645 = vcmp.eq.f32.partialorder %v1644, 8.507059e+37
    %v1646 = vand.u32 %v1634, 2147483648
    %v1647 = vor.u32 1.1754944e-38, %v1646
    %v1648 = vsel %vm1645, %v1647, %v1643
    %v1649 = vmul.f32 1.0, %v1648
    %v1650 = vadd.f32 %v1428, %v1614
    %v1651 = vxor.u32 %v1650, 2147483648
    %v1652 = vmul.f32 %v1651, 1.442695
    %v1653 = vpow.pop %v1652
    %v1654 = vadd.f32 %v1653, 1.0
    %v1655 = vrcp.pop %v1654
    %v1656 = vmul.f32 %v1654, %v1655
    %v1657 = vsub.f32 1.0, %v1656
    %v1658 = vmul.f32 %v1655, %v1657
    %v1659 = vadd.f32 %v1655, %v1658
    %vm1660 = vweird.f32 %v1654
    %vm1661 = vweird.f32 %v1655
    %vm1662 = vmor %vm1660, %vm1661
    %v1663 = vsel %vm1662, %v1655, %v1659
    %v1664 = vand.u32 2147483647, %v1654
    %vm1665 = vcmp.eq.f32.partialorder %v1664, 8.507059e+37
    %v1666 = vand.u32 %v1654, 2147483648
    %v1667 = vor.u32 1.1754944e-38, %v1666
    %v1668 = vsel %vm1665, %v1667, %v1663
    %v1669 = vmul.f32 1.0, %v1668
    %v1670 = vadd.f32 %v1627, %v405
    %v1671 = vmul.f32 %v1649, %v1670
    %v1672 = vadd.f32 %v1429, %v1671
    %v1673 = vtanh.pop %v1672
    %v1674 = vsub.f32 %v1422, %v1673
    %v1675 = vmul.f32 %v1669, %v1674
    %v1676 = vadd.f32 %v1673, %v1675
    %1677 = vst [vmem:[%s1426] sm:$0xff] %v1676
    %s1678 = smul.u32 5, 3
    %s1679 = smul.addr %s1678, 8
    %s1680 = scalar_lea.vmem [#allocation7], %s1679
    %v1681 = vld [vmem:[%s1680] sm:$0xff]
    %v1682 = vld [vmem:[%s1680 + $0x8] sm:$0xff]
    %v1683 = vld [vmem:[%s1680 + $0x10] sm:$0xff]
    %v1684 = vpack.c.bf16 %v1676, %v1676
    %v1685 = vld [vmem:[#allocation3] sm:$0xff]
    %v1686 = vld [vmem:[#allocation3 + $0x8] sm:$0xf]
    %v1687 = vld [vmem:[#allocation3 + $0xc] sm:$0xff]
    %v1688 = vld [vmem:[#allocation3 + $0x14] sm:$0xf]
    %v1689 = vld [vmem:[#allocation3 + $0x18] sm:$0xff]
    %v1690 = vld [vmem:[#allocation3 + $0x20] sm:$0xf]
    %v1691 = vld [vmem:[#allocation3 + $0x24] sm:$0xff]
    %v1692 = vld [vmem:[#allocation3 + $0x2c] sm:$0xf]
    %v1693 = vld [vmem:[#allocation3 + $0x30] sm:$0xff]
    %v1694 = vld [vmem:[#allocation3 + $0x38] sm:$0xf]
    %v1695 = vld [vmem:[#allocation3 + $0x3c] sm:$0xff]
    %v1696 = vld [vmem:[#allocation3 + $0x44] sm:$0xf]
    %v1697 = vld [vmem:[#allocation3 + $0x48] sm:$0xff]
    %v1698 = vld [vmem:[#allocation3 + $0x50] sm:$0xf]
    %v1699 = vld [vmem:[#allocation3 + $0x54] sm:$0xff]
    %v1700 = vld [vmem:[#allocation3 + $0x5c] sm:$0xf]
    %v1701 = vld [vmem:[#allocation3 + $0x60] sm:$0xff]
    %v1702 = vld [vmem:[#allocation3 + $0x68] sm:$0xf]
    %v1703 = vld [vmem:[#allocation3 + $0x6c] sm:$0xff]
    %v1704 = vld [vmem:[#allocation3 + $0x74] sm:$0xf]
    %v1705 = vld [vmem:[#allocation3 + $0x78] sm:$0xff]
    %v1706 = vld [vmem:[#allocation3 + $0x80] sm:$0xf]
    %v1707 = vld [vmem:[#allocation3 + $0x84] sm:$0xff]
    %v1708 = vld [vmem:[#allocation3 + $0x8c] sm:$0xf]
    %v1709 = vld [vmem:[#allocation3 + $0x90] sm:$0xff]
    %v1710 = vld [vmem:[#allocation3 + $0x98] sm:$0xf]
    %v1711 = vld [vmem:[#allocation3 + $0x9c] sm:$0xff]
    %v1712 = vld [vmem:[#allocation3 + $0xa4] sm:$0xf]
    %v1713 = vld [vmem:[#allocation3 + $0xa8] sm:$0xff]
    %v1714 = vld [vmem:[#allocation3 + $0xb0] sm:$0xf]
    %v1715 = vld [vmem:[#allocation3 + $0xb4] sm:$0xff]
    %v1716 = vld [vmem:[#allocation3 + $0xbc] sm:$0xf]
    %v1749 = vunpack.c.l.b16 %v1685
    %v1750 = vunpack.c.h.b16 %v1685
    %v1751 = vunpack.c.l.b16 %v1686
    %v1752 = vunpack.c.l.b16 %v1687
    %v1753 = vunpack.c.h.b16 %v1687
    %v1754 = vunpack.c.l.b16 %v1688
    %v1755 = vunpack.c.l.b16 %v1689
    %v1756 = vunpack.c.h.b16 %v1689
    %v1757 = vunpack.c.l.b16 %v1690
    %v1758 = vunpack.c.l.b16 %v1691
    %v1759 = vunpack.c.h.b16 %v1691
    %v1760 = vunpack.c.l.b16 %v1692
    %v1761 = vunpack.c.l.b16 %v1693
    %v1762 = vunpack.c.h.b16 %v1693
    %v1763 = vunpack.c.l.b16 %v1694
    %v1764 = vunpack.c.l.b16 %v1695
    %v1765 = vunpack.c.h.b16 %v1695
    %v1766 = vunpack.c.l.b16 %v1696
    %v1767 = vunpack.c.l.b16 %v1697
    %v1768 = vunpack.c.h.b16 %v1697
    %v1769 = vunpack.c.l.b16 %v1698
    %v1770 = vunpack.c.l.b16 %v1699
    %v1771 = vunpack.c.h.b16 %v1699
    %v1772 = vunpack.c.l.b16 %v1700
    %v1773 = vunpack.c.l.b16 %v1701
    %v1774 = vunpack.c.h.b16 %v1701
    %v1775 = vunpack.c.l.b16 %v1702
    %v1776 = vunpack.c.l.b16 %v1703
    %v1777 = vunpack.c.h.b16 %v1703
    %v1778 = vunpack.c.l.b16 %v1704
    %v1779 = vunpack.c.l.b16 %v1705
    %v1780 = vunpack.c.h.b16 %v1705
    %v1781 = vunpack.c.l.b16 %v1706
    %v1782 = vunpack.c.l.b16 %v1707
    %v1783 = vunpack.c.h.b16 %v1707
    %v1784 = vunpack.c.l.b16 %v1708
    %v1785 = vunpack.c.l.b16 %v1709
    %v1786 = vunpack.c.h.b16 %v1709
    %v1787 = vunpack.c.l.b16 %v1710
    %v1788 = vunpack.c.l.b16 %v1711
    %v1789 = vunpack.c.h.b16 %v1711
    %v1790 = vunpack.c.l.b16 %v1712
    %v1791 = vunpack.c.l.b16 %v1713
    %v1792 = vunpack.c.h.b16 %v1713
    %v1793 = vunpack.c.l.b16 %v1714
    %v1794 = vunpack.c.l.b16 %v1715
    %v1795 = vunpack.c.h.b16 %v1715
    %v1796 = vunpack.c.l.b16 %v1716
    %v1797 = vpack.c.b16 %v1752, %v1749
    %v1798 = vpack.c.b16 %v1753, %v1750
    %v1799 = vpack.c.b16 %v1754, %v1751
    %v1800 = vpack.c.b16 %v1758, %v1755
    %v1801 = vpack.c.b16 %v1759, %v1756
    %v1802 = vpack.c.b16 %v1760, %v1757
    %v1803 = vpack.c.b16 %v1764, %v1761
    %v1804 = vpack.c.b16 %v1765, %v1762
    %v1805 = vpack.c.b16 %v1766, %v1763
    %v1806 = vpack.c.b16 %v1770, %v1767
    %v1807 = vpack.c.b16 %v1771, %v1768
    %v1808 = vpack.c.b16 %v1772, %v1769
    %v1809 = vpack.c.b16 %v1776, %v1773
    %v1810 = vpack.c.b16 %v1777, %v1774
    %v1811 = vpack.c.b16 %v1778, %v1775
    %v1812 = vpack.c.b16 %v1782, %v1779
    %v1813 = vpack.c.b16 %v1783, %v1780
    %v1814 = vpack.c.b16 %v1784, %v1781
    %v1815 = vpack.c.b16 %v1788, %v1785
    %v1816 = vpack.c.b16 %v1789, %v1786
    %v1817 = vpack.c.b16 %v1790, %v1787
    %v1818 = vpack.c.b16 %v1794, %v1791
    %v1819 = vpack.c.b16 %v1795, %v1792
    %v1820 = vpack.c.b16 %v1796, %v1793
    %1845 = vmatpush.bf16.msra.mxu0 %v1818
    %1846 = vmatpush.bf16.msra.mxu0 %v1815
    %1847 = vmatpush.bf16.msra.mxu0 %v1812
    %1848 = vmatpush.bf16.msra.mxu0 %v1809
    %1849 = vmatpush.bf16.msra.mxu0 %v1806
    %1850 = vmatpush.bf16.msra.mxu0 %v1803
    %1851 = vmatpush.bf16.msra.mxu0 %v1800
    %1852 = vmatpush.bf16.msra.mxu0 %v1797
    %1853 = vmatmul.bf16.gmra.mxu0 %v1684
    %v1854 = vpop.f32.mrf.mxu0
    %v1855 = vadd.f32 0.0, %v1854
    %v1856 = vpop.f32.mrf.mxu0
    %1857 = vdwg.mxu0
    %1858 = vmatpush.bf16.msra.mxu0 %v1819
    %1859 = vmatpush.bf16.msra.mxu0 %v1816
    %1860 = vmatpush.bf16.msra.mxu0 %v1813
    %1861 = vmatpush.bf16.msra.mxu0 %v1810
    %1862 = vmatpush.bf16.msra.mxu0 %v1807
    %1863 = vmatpush.bf16.msra.mxu0 %v1804
    %1864 = vmatpush.bf16.msra.mxu0 %v1801
    %1865 = vmatpush.bf16.msra.mxu0 %v1798
    %1866 = vmatmul.bf16.gmra.mxu0 %v1684
    %v1867 = vpop.f32.mrf.mxu0
    %v1868 = vadd.f32 0.0, %v1867
    %v1869 = vpop.f32.mrf.mxu0
    %1870 = vdwg.mxu0
    %1871 = vmatpush.bf16.msra.mxu0 %v1820
    %1872 = vmatpush.bf16.msra.mxu0 %v1817
    %1873 = vmatpush.bf16.msra.mxu0 %v1814
    %1874 = vmatpush.bf16.msra.mxu0 %v1811
    %1875 = vmatpush.bf16.msra.mxu0 %v1808
    %1876 = vmatpush.bf16.msra.mxu0 %v1805
    %1877 = vmatpush.bf16.msra.mxu0 %v1802
    %1878 = vmatpush.bf16.msra.mxu0 %v1799
    %1879 = vmatmul.bf16.gmra.mxu0 %v1684
    %v1880 = vpop.f32.mrf.mxu0
    %v1881 = vadd.f32 0.0, %v1880
    %v1882 = vpop.f32.mrf.mxu0
    %1883 = vdwg.mxu0
    %v1884 = vadd.f32 %v1681, %v1855
    %v1885 = vxor.u32 %v1884, 2147483648
    %v1886 = vmul.f32 %v1885, 1.442695
    %v1887 = vpow.pop %v1886
    %v1888 = vadd.f32 %v1887, 1.0
    %v1889 = vrcp.pop %v1888
    %v1890 = vmul.f32 %v1888, %v1889
    %v1891 = vsub.f32 1.0, %v1890
    %v1892 = vmul.f32 %v1889, %v1891
    %v1893 = vadd.f32 %v1889, %v1892
    %vm1894 = vweird.f32 %v1888
    %vm1895 = vweird.f32 %v1889
    %vm1896 = vmor %vm1894, %vm1895
    %v1897 = vsel %vm1896, %v1889, %v1893
    %v1898 = vand.u32 2147483647, %v1888
    %vm1899 = vcmp.eq.f32.partialorder %v1898, 8.507059e+37
    %v1900 = vand.u32 %v1888, 2147483648
    %v1901 = vor.u32 1.1754944e-38, %v1900
    %v1902 = vsel %vm1899, %v1901, %v1897
    %v1903 = vmul.f32 1.0, %v1902
    %v1904 = vadd.f32 %v1682, %v1868
    %v1905 = vxor.u32 %v1904, 2147483648
    %v1906 = vmul.f32 %v1905, 1.442695
    %v1907 = vpow.pop %v1906
    %v1908 = vadd.f32 %v1907, 1.0
    %v1909 = vrcp.pop %v1908
    %v1910 = vmul.f32 %v1908, %v1909
    %v1911 = vsub.f32 1.0, %v1910
    %v1912 = vmul.f32 %v1909, %v1911
    %v1913 = vadd.f32 %v1909, %v1912
    %vm1914 = vweird.f32 %v1908
    %vm1915 = vweird.f32 %v1909
    %vm1916 = vmor %vm1914, %vm1915
    %v1917 = vsel %vm1916, %v1909, %v1913
    %v1918 = vand.u32 2147483647, %v1908
    %vm1919 = vcmp.eq.f32.partialorder %v1918, 8.507059e+37
    %v1920 = vand.u32 %v1908, 2147483648
    %v1921 = vor.u32 1.1754944e-38, %v1920
    %v1922 = vsel %vm1919, %v1921, %v1917
    %v1923 = vmul.f32 1.0, %v1922
    %v1924 = vadd.f32 %v1881, %v405
    %v1925 = vmul.f32 %v1903, %v1924
    %v1926 = vadd.f32 %v1683, %v1925
    %v1927 = vtanh.pop %v1926
    %v1928 = vsub.f32 %v1676, %v1927
    %v1929 = vmul.f32 %v1923, %v1928
    %v1930 = vadd.f32 %v1927, %v1929
    %1931 = vst [vmem:[%s1680] sm:$0xff] %v1930
    %s1932 = smul.u32 6, 3
    %s1933 = smul.addr %s1932, 8
    %s1934 = scalar_lea.vmem [#allocation7], %s1933
    %v1935 = vld [vmem:[%s1934] sm:$0xff]
    %v1936 = vld [vmem:[%s1934 + $0x8] sm:$0xff]
    %v1937 = vld [vmem:[%s1934 + $0x10] sm:$0xff]
    %v1938 = vpack.c.bf16 %v1930, %v1930
    %v1939 = vld [vmem:[#allocation3] sm:$0xff]
    %v1940 = vld [vmem:[#allocation3 + $0x8] sm:$0xf]
    %v1941 = vld [vmem:[#allocation3 + $0xc] sm:$0xff]
    %v1942 = vld [vmem:[#allocation3 + $0x14] sm:$0xf]
    %v1943 = vld [vmem:[#allocation3 + $0x18] sm:$0xff]
    %v1944 = vld [vmem:[#allocation3 + $0x20] sm:$0xf]
    %v1945 = vld [vmem:[#allocation3 + $0x24] sm:$0xff]
    %v1946 = vld [vmem:[#allocation3 + $0x2c] sm:$0xf]
    %v1947 = vld [vmem:[#allocation3 + $0x30] sm:$0xff]
    %v1948 = vld [vmem:[#allocation3 + $0x38] sm:$0xf]
    %v1949 = vld [vmem:[#allocation3 + $0x3c] sm:$0xff]
    %v1950 = vld [vmem:[#allocation3 + $0x44] sm:$0xf]
    %v1951 = vld [vmem:[#allocation3 + $0x48] sm:$0xff]
    %v1952 = vld [vmem:[#allocation3 + $0x50] sm:$0xf]
    %v1953 = vld [vmem:[#allocation3 + $0x54] sm:$0xff]
    %v1954 = vld [vmem:[#allocation3 + $0x5c] sm:$0xf]
    %v1955 = vld [vmem:[#allocation3 + $0x60] sm:$0xff]
    %v1956 = vld [vmem:[#allocation3 + $0x68] sm:$0xf]
    %v1957 = vld [vmem:[#allocation3 + $0x6c] sm:$0xff]
    %v1958 = vld [vmem:[#allocation3 + $0x74] sm:$0xf]
    %v1959 = vld [vmem:[#allocation3 + $0x78] sm:$0xff]
    %v1960 = vld [vmem:[#allocation3 + $0x80] sm:$0xf]
    %v1961 = vld [vmem:[#allocation3 + $0x84] sm:$0xff]
    %v1962 = vld [vmem:[#allocation3 + $0x8c] sm:$0xf]
    %v1963 = vld [vmem:[#allocation3 + $0x90] sm:$0xff]
    %v1964 = vld [vmem:[#allocation3 + $0x98] sm:$0xf]
    %v1965 = vld [vmem:[#allocation3 + $0x9c] sm:$0xff]
    %v1966 = vld [vmem:[#allocation3 + $0xa4] sm:$0xf]
    %v1967 = vld [vmem:[#allocation3 + $0xa8] sm:$0xff]
    %v1968 = vld [vmem:[#allocation3 + $0xb0] sm:$0xf]
    %v1969 = vld [vmem:[#allocation3 + $0xb4] sm:$0xff]
    %v1970 = vld [vmem:[#allocation3 + $0xbc] sm:$0xf]
    %v2003 = vunpack.c.l.b16 %v1939
    %v2004 = vunpack.c.h.b16 %v1939
    %v2005 = vunpack.c.l.b16 %v1940
    %v2006 = vunpack.c.l.b16 %v1941
    %v2007 = vunpack.c.h.b16 %v1941
    %v2008 = vunpack.c.l.b16 %v1942
    %v2009 = vunpack.c.l.b16 %v1943
    %v2010 = vunpack.c.h.b16 %v1943
    %v2011 = vunpack.c.l.b16 %v1944
    %v2012 = vunpack.c.l.b16 %v1945
    %v2013 = vunpack.c.h.b16 %v1945
    %v2014 = vunpack.c.l.b16 %v1946
    %v2015 = vunpack.c.l.b16 %v1947
    %v2016 = vunpack.c.h.b16 %v1947
    %v2017 = vunpack.c.l.b16 %v1948
    %v2018 = vunpack.c.l.b16 %v1949
    %v2019 = vunpack.c.h.b16 %v1949
    %v2020 = vunpack.c.l.b16 %v1950
    %v2021 = vunpack.c.l.b16 %v1951
    %v2022 = vunpack.c.h.b16 %v1951
    %v2023 = vunpack.c.l.b16 %v1952
    %v2024 = vunpack.c.l.b16 %v1953
    %v2025 = vunpack.c.h.b16 %v1953
    %v2026 = vunpack.c.l.b16 %v1954
    %v2027 = vunpack.c.l.b16 %v1955
    %v2028 = vunpack.c.h.b16 %v1955
    %v2029 = vunpack.c.l.b16 %v1956
    %v2030 = vunpack.c.l.b16 %v1957
    %v2031 = vunpack.c.h.b16 %v1957
    %v2032 = vunpack.c.l.b16 %v1958
    %v2033 = vunpack.c.l.b16 %v1959
    %v2034 = vunpack.c.h.b16 %v1959
    %v2035 = vunpack.c.l.b16 %v1960
    %v2036 = vunpack.c.l.b16 %v1961
    %v2037 = vunpack.c.h.b16 %v1961
    %v2038 = vunpack.c.l.b16 %v1962
    %v2039 = vunpack.c.l.b16 %v1963
    %v2040 = vunpack.c.h.b16 %v1963
    %v2041 = vunpack.c.l.b16 %v1964
    %v2042 = vunpack.c.l.b16 %v1965
    %v2043 = vunpack.c.h.b16 %v1965
    %v2044 = vunpack.c.l.b16 %v1966
    %v2045 = vunpack.c.l.b16 %v1967
    %v2046 = vunpack.c.h.b16 %v1967
    %v2047 = vunpack.c.l.b16 %v1968
    %v2048 = vunpack.c.l.b16 %v1969
    %v2049 = vunpack.c.h.b16 %v1969
    %v2050 = vunpack.c.l.b16 %v1970
    %v2051 = vpack.c.b16 %v2006, %v2003
    %v2052 = vpack.c.b16 %v2007, %v2004
    %v2053 = vpack.c.b16 %v2008, %v2005
    %v2054 = vpack.c.b16 %v2012, %v2009
    %v2055 = vpack.c.b16 %v2013, %v2010
    %v2056 = vpack.c.b16 %v2014, %v2011
    %v2057 = vpack.c.b16 %v2018, %v2015
    %v2058 = vpack.c.b16 %v2019, %v2016
    %v2059 = vpack.c.b16 %v2020, %v2017
    %v2060 = vpack.c.b16 %v2024, %v2021
    %v2061 = vpack.c.b16 %v2025, %v2022
    %v2062 = vpack.c.b16 %v2026, %v2023
    %v2063 = vpack.c.b16 %v2030, %v2027
    %v2064 = vpack.c.b16 %v2031, %v2028
    %v2065 = vpack.c.b16 %v2032, %v2029
    %v2066 = vpack.c.b16 %v2036, %v2033
    %v2067 = vpack.c.b16 %v2037, %v2034
    %v2068 = vpack.c.b16 %v2038, %v2035
    %v2069 = vpack.c.b16 %v2042, %v2039
    %v2070 = vpack.c.b16 %v2043, %v2040
    %v2071 = vpack.c.b16 %v2044, %v2041
    %v2072 = vpack.c.b16 %v2048, %v2045
    %v2073 = vpack.c.b16 %v2049, %v2046
    %v2074 = vpack.c.b16 %v2050, %v2047
    %2099 = vmatpush.bf16.msra.mxu0 %v2072
    %2100 = vmatpush.bf16.msra.mxu0 %v2069
    %2101 = vmatpush.bf16.msra.mxu0 %v2066
    %2102 = vmatpush.bf16.msra.mxu0 %v2063
    %2103 = vmatpush.bf16.msra.mxu0 %v2060
    %2104 = vmatpush.bf16.msra.mxu0 %v2057
    %2105 = vmatpush.bf16.msra.mxu0 %v2054
    %2106 = vmatpush.bf16.msra.mxu0 %v2051
    %2107 = vmatmul.bf16.gmra.mxu0 %v1938
    %v2108 = vpop.f32.mrf.mxu0
    %v2109 = vadd.f32 0.0, %v2108
    %v2110 = vpop.f32.mrf.mxu0
    %2111 = vdwg.mxu0
    %2112 = vmatpush.bf16.msra.mxu0 %v2073
    %2113 = vmatpush.bf16.msra.mxu0 %v2070
    %2114 = vmatpush.bf16.msra.mxu0 %v2067
    %2115 = vmatpush.bf16.msra.mxu0 %v2064
    %2116 = vmatpush.bf16.msra.mxu0 %v2061
    %2117 = vmatpush.bf16.msra.mxu0 %v2058
    %2118 = vmatpush.bf16.msra.mxu0 %v2055
    %2119 = vmatpush.bf16.msra.mxu0 %v2052
    %2120 = vmatmul.bf16.gmra.mxu0 %v1938
    %v2121 = vpop.f32.mrf.mxu0
    %v2122 = vadd.f32 0.0, %v2121
    %v2123 = vpop.f32.mrf.mxu0
    %2124 = vdwg.mxu0
    %2125 = vmatpush.bf16.msra.mxu0 %v2074
    %2126 = vmatpush.bf16.msra.mxu0 %v2071
    %2127 = vmatpush.bf16.msra.mxu0 %v2068
    %2128 = vmatpush.bf16.msra.mxu0 %v2065
    %2129 = vmatpush.bf16.msra.mxu0 %v2062
    %2130 = vmatpush.bf16.msra.mxu0 %v2059
    %2131 = vmatpush.bf16.msra.mxu0 %v2056
    %2132 = vmatpush.bf16.msra.mxu0 %v2053
    %2133 = vmatmul.bf16.gmra.mxu0 %v1938
    %v2134 = vpop.f32.mrf.mxu0
    %v2135 = vadd.f32 0.0, %v2134
    %v2136 = vpop.f32.mrf.mxu0
    %2137 = vdwg.mxu0
    %v2138 = vadd.f32 %v1935, %v2109
    %v2139 = vxor.u32 %v2138, 2147483648
    %v2140 = vmul.f32 %v2139, 1.442695
    %v2141 = vpow.pop %v2140
    %v2142 = vadd.f32 %v2141, 1.0
    %v2143 = vrcp.pop %v2142
    %v2144 = vmul.f32 %v2142, %v2143
    %v2145 = vsub.f32 1.0, %v2144
    %v2146 = vmul.f32 %v2143, %v2145
    %v2147 = vadd.f32 %v2143, %v2146
    %vm2148 = vweird.f32 %v2142
    %vm2149 = vweird.f32 %v2143
    %vm2150 = vmor %vm2148, %vm2149
    %v2151 = vsel %vm2150, %v2143, %v2147
    %v2152 = vand.u32 2147483647, %v2142
    %vm2153 = vcmp.eq.f32.partialorder %v2152, 8.507059e+37
    %v2154 = vand.u32 %v2142, 2147483648
    %v2155 = vor.u32 1.1754944e-38, %v2154
    %v2156 = vsel %vm2153, %v2155, %v2151
    %v2157 = vmul.f32 1.0, %v2156
    %v2158 = vadd.f32 %v1936, %v2122
    %v2159 = vxor.u32 %v2158, 2147483648
    %v2160 = vmul.f32 %v2159, 1.442695
    %v2161 = vpow.pop %v2160
    %v2162 = vadd.f32 %v2161, 1.0
    %v2163 = vrcp.pop %v2162
    %v2164 = vmul.f32 %v2162, %v2163
    %v2165 = vsub.f32 1.0, %v2164
    %v2166 = vmul.f32 %v2163, %v2165
    %v2167 = vadd.f32 %v2163, %v2166
    %vm2168 = vweird.f32 %v2162
    %vm2169 = vweird.f32 %v2163
    %vm2170 = vmor %vm2168, %vm2169
    %v2171 = vsel %vm2170, %v2163, %v2167
    %v2172 = vand.u32 2147483647, %v2162
    %vm2173 = vcmp.eq.f32.partialorder %v2172, 8.507059e+37
    %v2174 = vand.u32 %v2162, 2147483648
    %v2175 = vor.u32 1.1754944e-38, %v2174
    %v2176 = vsel %vm2173, %v2175, %v2171
    %v2177 = vmul.f32 1.0, %v2176
    %v2178 = vadd.f32 %v2135, %v405
    %v2179 = vmul.f32 %v2157, %v2178
    %v2180 = vadd.f32 %v1937, %v2179
    %v2181 = vtanh.pop %v2180
    %v2182 = vsub.f32 %v1930, %v2181
    %v2183 = vmul.f32 %v2177, %v2182
    %v2184 = vadd.f32 %v2181, %v2183
    %2185 = vst [vmem:[%s1934] sm:$0xff] %v2184
    %s2186 = smul.u32 7, 3
    %s2187 = smul.addr %s2186, 8
    %s2188 = scalar_lea.vmem [#allocation7], %s2187
    %v2189 = vld [vmem:[%s2188] sm:$0xff]
    %v2190 = vld [vmem:[%s2188 + $0x8] sm:$0xff]
    %v2191 = vld [vmem:[%s2188 + $0x10] sm:$0xff]
    %v2192 = vpack.c.bf16 %v2184, %v2184
    %v2193 = vld [vmem:[#allocation3] sm:$0xff]
    %v2194 = vld [vmem:[#allocation3 + $0x8] sm:$0xf]
    %v2195 = vld [vmem:[#allocation3 + $0xc] sm:$0xff]
    %v2196 = vld [vmem:[#allocation3 + $0x14] sm:$0xf]
    %v2197 = vld [vmem:[#allocation3 + $0x18] sm:$0xff]
    %v2198 = vld [vmem:[#allocation3 + $0x20] sm:$0xf]
    %v2199 = vld [vmem:[#allocation3 + $0x24] sm:$0xff]
    %v2200 = vld [vmem:[#allocation3 + $0x2c] sm:$0xf]
    %v2201 = vld [vmem:[#allocation3 + $0x30] sm:$0xff]
    %v2202 = vld [vmem:[#allocation3 + $0x38] sm:$0xf]
    %v2203 = vld [vmem:[#allocation3 + $0x3c] sm:$0xff]
    %v2204 = vld [vmem:[#allocation3 + $0x44] sm:$0xf]
    %v2205 = vld [vmem:[#allocation3 + $0x48] sm:$0xff]
    %v2206 = vld [vmem:[#allocation3 + $0x50] sm:$0xf]
    %v2207 = vld [vmem:[#allocation3 + $0x54] sm:$0xff]
    %v2208 = vld [vmem:[#allocation3 + $0x5c] sm:$0xf]
    %v2209 = vld [vmem:[#allocation3 + $0x60] sm:$0xff]
    %v2210 = vld [vmem:[#allocation3 + $0x68] sm:$0xf]
    %v2211 = vld [vmem:[#allocation3 + $0x6c] sm:$0xff]
    %v2212 = vld [vmem:[#allocation3 + $0x74] sm:$0xf]
    %v2213 = vld [vmem:[#allocation3 + $0x78] sm:$0xff]
    %v2214 = vld [vmem:[#allocation3 + $0x80] sm:$0xf]
    %v2215 = vld [vmem:[#allocation3 + $0x84] sm:$0xff]
    %v2216 = vld [vmem:[#allocation3 + $0x8c] sm:$0xf]
    %v2217 = vld [vmem:[#allocation3 + $0x90] sm:$0xff]
    %v2218 = vld [vmem:[#allocation3 + $0x98] sm:$0xf]
    %v2219 = vld [vmem:[#allocation3 + $0x9c] sm:$0xff]
    %v2220 = vld [vmem:[#allocation3 + $0xa4] sm:$0xf]
    %v2221 = vld [vmem:[#allocation3 + $0xa8] sm:$0xff]
    %v2222 = vld [vmem:[#allocation3 + $0xb0] sm:$0xf]
    %v2223 = vld [vmem:[#allocation3 + $0xb4] sm:$0xff]
    %v2224 = vld [vmem:[#allocation3 + $0xbc] sm:$0xf]
    %v2257 = vunpack.c.l.b16 %v2193
    %v2258 = vunpack.c.h.b16 %v2193
    %v2259 = vunpack.c.l.b16 %v2194
    %v2260 = vunpack.c.l.b16 %v2195
    %v2261 = vunpack.c.h.b16 %v2195
    %v2262 = vunpack.c.l.b16 %v2196
    %v2263 = vunpack.c.l.b16 %v2197
    %v2264 = vunpack.c.h.b16 %v2197
    %v2265 = vunpack.c.l.b16 %v2198
    %v2266 = vunpack.c.l.b16 %v2199
    %v2267 = vunpack.c.h.b16 %v2199
    %v2268 = vunpack.c.l.b16 %v2200
    %v2269 = vunpack.c.l.b16 %v2201
    %v2270 = vunpack.c.h.b16 %v2201
    %v2271 = vunpack.c.l.b16 %v2202
    %v2272 = vunpack.c.l.b16 %v2203
    %v2273 = vunpack.c.h.b16 %v2203
    %v2274 = vunpack.c.l.b16 %v2204
    %v2275 = vunpack.c.l.b16 %v2205
    %v2276 = vunpack.c.h.b16 %v2205
    %v2277 = vunpack.c.l.b16 %v2206
    %v2278 = vunpack.c.l.b16 %v2207
    %v2279 = vunpack.c.h.b16 %v2207
    %v2280 = vunpack.c.l.b16 %v2208
    %v2281 = vunpack.c.l.b16 %v2209
    %v2282 = vunpack.c.h.b16 %v2209
    %v2283 = vunpack.c.l.b16 %v2210
    %v2284 = vunpack.c.l.b16 %v2211
    %v2285 = vunpack.c.h.b16 %v2211
    %v2286 = vunpack.c.l.b16 %v2212
    %v2287 = vunpack.c.l.b16 %v2213
    %v2288 = vunpack.c.h.b16 %v2213
    %v2289 = vunpack.c.l.b16 %v2214
    %v2290 = vunpack.c.l.b16 %v2215
    %v2291 = vunpack.c.h.b16 %v2215
    %v2292 = vunpack.c.l.b16 %v2216
    %v2293 = vunpack.c.l.b16 %v2217
    %v2294 = vunpack.c.h.b16 %v2217
    %v2295 = vunpack.c.l.b16 %v2218
    %v2296 = vunpack.c.l.b16 %v2219
    %v2297 = vunpack.c.h.b16 %v2219
    %v2298 = vunpack.c.l.b16 %v2220
    %v2299 = vunpack.c.l.b16 %v2221
    %v2300 = vunpack.c.h.b16 %v2221
    %v2301 = vunpack.c.l.b16 %v2222
    %v2302 = vunpack.c.l.b16 %v2223
    %v2303 = vunpack.c.h.b16 %v2223
    %v2304 = vunpack.c.l.b16 %v2224
    %v2305 = vpack.c.b16 %v2260, %v2257
    %v2306 = vpack.c.b16 %v2261, %v2258
    %v2307 = vpack.c.b16 %v2262, %v2259
    %v2308 = vpack.c.b16 %v2266, %v2263
    %v2309 = vpack.c.b16 %v2267, %v2264
    %v2310 = vpack.c.b16 %v2268, %v2265
    %v2311 = vpack.c.b16 %v2272, %v2269
    %v2312 = vpack.c.b16 %v2273, %v2270
    %v2313 = vpack.c.b16 %v2274, %v2271
    %v2314 = vpack.c.b16 %v2278, %v2275
    %v2315 = vpack.c.b16 %v2279, %v2276
    %v2316 = vpack.c.b16 %v2280, %v2277
    %v2317 = vpack.c.b16 %v2284, %v2281
    %v2318 = vpack.c.b16 %v2285, %v2282
    %v2319 = vpack.c.b16 %v2286, %v2283
    %v2320 = vpack.c.b16 %v2290, %v2287
    %v2321 = vpack.c.b16 %v2291, %v2288
    %v2322 = vpack.c.b16 %v2292, %v2289
    %v2323 = vpack.c.b16 %v2296, %v2293
    %v2324 = vpack.c.b16 %v2297, %v2294
    %v2325 = vpack.c.b16 %v2298, %v2295
    %v2326 = vpack.c.b16 %v2302, %v2299
    %v2327 = vpack.c.b16 %v2303, %v2300
    %v2328 = vpack.c.b16 %v2304, %v2301
    %2353 = vmatpush.bf16.msra.mxu0 %v2326
    %2354 = vmatpush.bf16.msra.mxu0 %v2323
    %2355 = vmatpush.bf16.msra.mxu0 %v2320
    %2356 = vmatpush.bf16.msra.mxu0 %v2317
    %2357 = vmatpush.bf16.msra.mxu0 %v2314
    %2358 = vmatpush.bf16.msra.mxu0 %v2311
    %2359 = vmatpush.bf16.msra.mxu0 %v2308
    %2360 = vmatpush.bf16.msra.mxu0 %v2305
    %2361 = vmatmul.bf16.gmra.mxu0 %v2192
    %v2362 = vpop.f32.mrf.mxu0
    %v2363 = vadd.f32 0.0, %v2362
    %v2364 = vpop.f32.mrf.mxu0
    %2365 = vdwg.mxu0
    %2366 = vmatpush.bf16.msra.mxu0 %v2327
    %2367 = vmatpush.bf16.msra.mxu0 %v2324
    %2368 = vmatpush.bf16.msra.mxu0 %v2321
    %2369 = vmatpush.bf16.msra.mxu0 %v2318
    %2370 = vmatpush.bf16.msra.mxu0 %v2315
    %2371 = vmatpush.bf16.msra.mxu0 %v2312
    %2372 = vmatpush.bf16.msra.mxu0 %v2309
    %2373 = vmatpush.bf16.msra.mxu0 %v2306
    %2374 = vmatmul.bf16.gmra.mxu0 %v2192
    %v2375 = vpop.f32.mrf.mxu0
    %v2376 = vadd.f32 0.0, %v2375
    %v2377 = vpop.f32.mrf.mxu0
    %2378 = vdwg.mxu0
    %2379 = vmatpush.bf16.msra.mxu0 %v2328
    %2380 = vmatpush.bf16.msra.mxu0 %v2325
    %2381 = vmatpush.bf16.msra.mxu0 %v2322
    %2382 = vmatpush.bf16.msra.mxu0 %v2319
    %2383 = vmatpush.bf16.msra.mxu0 %v2316
    %2384 = vmatpush.bf16.msra.mxu0 %v2313
    %2385 = vmatpush.bf16.msra.mxu0 %v2310
    %2386 = vmatpush.bf16.msra.mxu0 %v2307
    %2387 = vmatmul.bf16.gmra.mxu0 %v2192
    %v2388 = vpop.f32.mrf.mxu0
    %v2389 = vadd.f32 0.0, %v2388
    %v2390 = vpop.f32.mrf.mxu0
    %2391 = vdwg.mxu0
    %v2392 = vadd.f32 %v2189, %v2363
    %v2393 = vxor.u32 %v2392, 2147483648
    %v2394 = vmul.f32 %v2393, 1.442695
    %v2395 = vpow.pop %v2394
    %v2396 = vadd.f32 %v2395, 1.0
    %v2397 = vrcp.pop %v2396
    %v2398 = vmul.f32 %v2396, %v2397
    %v2399 = vsub.f32 1.0, %v2398
    %v2400 = vmul.f32 %v2397, %v2399
    %v2401 = vadd.f32 %v2397, %v2400
    %vm2402 = vweird.f32 %v2396
    %vm2403 = vweird.f32 %v2397
    %vm2404 = vmor %vm2402, %vm2403
    %v2405 = vsel %vm2404, %v2397, %v2401
    %v2406 = vand.u32 2147483647, %v2396
    %vm2407 = vcmp.eq.f32.partialorder %v2406, 8.507059e+37
    %v2408 = vand.u32 %v2396, 2147483648
    %v2409 = vor.u32 1.1754944e-38, %v2408
    %v2410 = vsel %vm2407, %v2409, %v2405
    %v2411 = vmul.f32 1.0, %v2410
    %v2412 = vadd.f32 %v2190, %v2376
    %v2413 = vxor.u32 %v2412, 2147483648
    %v2414 = vmul.f32 %v2413, 1.442695
    %v2415 = vpow.pop %v2414
    %v2416 = vadd.f32 %v2415, 1.0
    %v2417 = vrcp.pop %v2416
    %v2418 = vmul.f32 %v2416, %v2417
    %v2419 = vsub.f32 1.0, %v2418
    %v2420 = vmul.f32 %v2417, %v2419
    %v2421 = vadd.f32 %v2417, %v2420
    %vm2422 = vweird.f32 %v2416
    %vm2423 = vweird.f32 %v2417
    %vm2424 = vmor %vm2422, %vm2423
    %v2425 = vsel %vm2424, %v2417, %v2421
    %v2426 = vand.u32 2147483647, %v2416
    %vm2427 = vcmp.eq.f32.partialorder %v2426, 8.507059e+37
    %v2428 = vand.u32 %v2416, 2147483648
    %v2429 = vor.u32 1.1754944e-38, %v2428
    %v2430 = vsel %vm2427, %v2429, %v2425
    %v2431 = vmul.f32 1.0, %v2430
    %v2432 = vadd.f32 %v2389, %v405
    %v2433 = vmul.f32 %v2411, %v2432
    %v2434 = vadd.f32 %v2191, %v2433
    %v2435 = vtanh.pop %v2434
    %v2436 = vsub.f32 %v2184, %v2435
    %v2437 = vmul.f32 %v2431, %v2436
    %v2438 = vadd.f32 %v2435, %v2437
    %2439 = vst [vmem:[%s2188] sm:$0xff] %v2438
    %2440 = vst [vmem:[#allocation6] sm:$0xff] %v2438
    %v2441 = vld [vmem:[#allocation7] sm:$0xff]
    %v2442 = vld [vmem:[#allocation7 + $0x18] sm:$0xff]
    %v2443 = vld [vmem:[#allocation7 + $0x30] sm:$0xff]
    %v2444 = vld [vmem:[#allocation7 + $0x48] sm:$0xff]
    %v2445 = vld [vmem:[#allocation7 + $0x60] sm:$0xff]
    %v2446 = vld [vmem:[#allocation7 + $0x78] sm:$0xff]
    %v2447 = vld [vmem:[#allocation7 + $0x90] sm:$0xff]
    %v2448 = vld [vmem:[#allocation7 + $0xa8] sm:$0xff]
    %v2449 = vmax.f32 %v2441, 0.0
    %v2450 = vmax.f32 %v2442, 0.0
    %v2451 = vmax.f32 %v2443, 0.0
    %v2452 = vmax.f32 %v2444, 0.0
    %v2453 = vmax.f32 %v2445, 0.0
    %v2454 = vmax.f32 %v2446, 0.0
    %v2455 = vmax.f32 %v2447, 0.0
    %v2456 = vmax.f32 %v2448, 0.0
    %v2457 = vpack.c.bf16 %v2450, %v2449
    %v2458 = vpack.c.bf16 %v2452, %v2451
    %v2459 = vpack.c.bf16 %v2454, %v2453
    %v2460 = vpack.c.bf16 %v2456, %v2455
    %v2461 = vld [vmem:[#allocation4] sm:$0xf]
    %v2462 = vld [vmem:[#allocation4 + $0x4] sm:$0xf]
    %v2463 = vld [vmem:[#allocation4 + $0x8] sm:$0xf]
    %v2464 = vld [vmem:[#allocation4 + $0xc] sm:$0xf]
    %v2465 = vld [vmem:[#allocation4 + $0x10] sm:$0xf]
    %v2466 = vld [vmem:[#allocation4 + $0x14] sm:$0xf]
    %v2467 = vld [vmem:[#allocation4 + $0x18] sm:$0xf]
    %v2468 = vld [vmem:[#allocation4 + $0x1c] sm:$0xf]
    %v2469 = vld [vmem:[#allocation4 + $0x20] sm:$0xf]
    %v2470 = vld [vmem:[#allocation4 + $0x24] sm:$0xf]
    %v2471 = vld [vmem:[#allocation4 + $0x28] sm:$0xf]
    %v2472 = vld [vmem:[#allocation4 + $0x2c] sm:$0xf]
    %v2473 = vld [vmem:[#allocation4 + $0x30] sm:$0xf]
    %v2474 = vld [vmem:[#allocation4 + $0x34] sm:$0xf]
    %v2475 = vld [vmem:[#allocation4 + $0x38] sm:$0xf]
    %v2476 = vld [vmem:[#allocation4 + $0x3c] sm:$0xf]
    %v2477 = vld [vmem:[%s6] sm:$0x1]
    %v2479 = vperm.slane %v2477, 0
    %v2497 = vunpack.c.l.b16 %v2461
    %v2498 = vunpack.c.l.b16 %v2462
    %v2499 = vunpack.c.l.b16 %v2463
    %v2500 = vunpack.c.l.b16 %v2464
    %v2501 = vunpack.c.l.b16 %v2465
    %v2502 = vunpack.c.l.b16 %v2466
    %v2503 = vunpack.c.l.b16 %v2467
    %v2504 = vunpack.c.l.b16 %v2468
    %v2505 = vunpack.c.l.b16 %v2469
    %v2506 = vunpack.c.l.b16 %v2470
    %v2507 = vunpack.c.l.b16 %v2471
    %v2508 = vunpack.c.l.b16 %v2472
    %v2509 = vunpack.c.l.b16 %v2473
    %v2510 = vunpack.c.l.b16 %v2474
    %v2511 = vunpack.c.l.b16 %v2475
    %v2512 = vunpack.c.l.b16 %v2476
    %v2513 = vpack.c.b16 %v2498, %v2497
    %v2514 = vpack.c.b16 %v2500, %v2499
    %v2515 = vpack.c.b16 %v2502, %v2501
    %v2516 = vpack.c.b16 %v2504, %v2503
    %v2517 = vpack.c.b16 %v2506, %v2505
    %v2518 = vpack.c.b16 %v2508, %v2507
    %v2519 = vpack.c.b16 %v2510, %v2509
    %v2520 = vpack.c.b16 %v2512, %v2511
    %2529 = vmatpush.bf16.msra.mxu0 %v2520
    %2530 = vmatpush.bf16.msra.mxu0 %v2519
    %2531 = vmatpush.bf16.msra.mxu0 %v2518
    %2532 = vmatpush.bf16.msra.mxu0 %v2517
    %2533 = vmatpush.bf16.msra.mxu0 %v2516
    %2534 = vmatpush.bf16.msra.mxu0 %v2515
    %2535 = vmatpush.bf16.msra.mxu0 %v2514
    %2536 = vmatpush.bf16.msra.mxu0 %v2513
    %2537 = vmatmul.bf16.gmra.mxu0 %v2457
    %v2538 = vpop.f32.mrf.mxu0
    %v2539 = vadd.f32 %v2479, %v2538
    %v2540 = vpop.f32.mrf.mxu0
    %v2541 = vadd.f32 %v2479, %v2540
    %2542 = vmatmul.bf16.gmra.mxu0 %v2458
    %v2543 = vpop.f32.mrf.mxu0
    %v2544 = vadd.f32 %v2479, %v2543
    %v2545 = vpop.f32.mrf.mxu0
    %v2546 = vadd.f32 %v2479, %v2545
    %2547 = vmatmul.bf16.gmra.mxu0 %v2459
    %v2548 = vpop.f32.mrf.mxu0
    %v2549 = vadd.f32 %v2479, %v2548
    %v2550 = vpop.f32.mrf.mxu0
    %v2551 = vadd.f32 %v2479, %v2550
    %2552 = vmatmul.bf16.gmra.mxu0 %v2460
    %v2553 = vpop.f32.mrf.mxu0
    %v2554 = vadd.f32 %v2479, %v2553
    %v2555 = vpop.f32.mrf.mxu0
    %v2556 = vadd.f32 %v2479, %v2555
    %2557 = vdwg.mxu0
    %2558 = vst [vmem:[#allocation11] sm:$0xff] %v2539
    %2559 = vst [vmem:[#allocation11 + $0x8] sm:$0xff] %v2541
    %2560 = vst [vmem:[#allocation11 + $0x10] sm:$0xff] %v2544
    %2561 = vst [vmem:[#allocation11 + $0x18] sm:$0xff] %v2546
    %2562 = vst [vmem:[#allocation11 + $0x20] sm:$0xff] %v2549
    %2563 = vst [vmem:[#allocation11 + $0x28] sm:$0xff] %v2551
    %2564 = vst [vmem:[#allocation11 + $0x30] sm:$0xff] %v2554
    %2565 = vst [vmem:[#allocation11 + $0x38] sm:$0xff] %v2556
    // Predicated region
    $region38: #{tpu_custom_call.1} parent=1 // pred_check
      _
    $region39: #{tpu_custom_call.1} parent=1 // pred_check_branch
      %2567 = sbr.rel (0) target = $region41
    $region40: #{tpu_custom_call.1} parent=1 // pred_region
      %2569 = vsyncadd [#allocation10], 0
      %s2570 = sshll.u32 [#allocation11], 4
      %s2571 = int_to_ptr.vmem [resolvable:$true] %s2570
      %s2572 = sshll.u32 %s7, 4
      %s2573 = int_to_ptr.hbm [resolvable:$true] %s2572
      %2578 = dma.vmem_to_hbm [thread:$0]  %s2571, 1024, %s2573, [#allocation10], 128, 128, 8
    $region41: #{tpu_custom_call.1} parent=1 // pred_fallthru
      _
    // Predicated region
    $region42: #{tpu_custom_call.1} parent=1 // pred_check
      _
    $region43: #{tpu_custom_call.1} parent=1 // pred_check_branch
      %2580 = sbr.rel (0) target = $region45
    $region44: #{tpu_custom_call.1} parent=1 // pred_region
      %2582 = dma.done [#allocation10], 1024
    $region45: #{tpu_custom_call.1} parent=1 // pred_fallthru
      _
    %2583 = vsyncpa [#allocation9], 1
    %2584 = vsyncpa [#allocation10], 1
  %2585 = vsyncmov [#allocation5]
  %s2586 = vpop.sfrf %2585
  %p2587 = scmp.eq.s32.totalorder %s2586, 0
  %p2588 = pneg %p2587
  %2590 = shalt.err (%p2588)
  %s2591 = scalar_lea.sflag [#allocation5], 1
  %2592 = vsyncmov %s2591
  %s2593 = vpop.sfrf %2592
  %p2594 = scmp.eq.s32.totalorder %s2593, 0
  %p2595 = pneg %p2594
  %2597 = shalt.err (%p2595)
  %s2598 = scalar_lea.sflag [#allocation5], 2
  %2599 = vsyncmov %s2598
  %s2600 = vpop.sfrf %2599
  %p2601 = scmp.eq.s32.totalorder %s2600, 0
  %p2602 = pneg %p2601
  %2604 = shalt.err (%p2602)

</llo_original>
